<compile_context>
chip_gen: v5e
topology: v5e:2x2
jax: 0.10.0
libtpu: 0.0.40
codegen_flags: <defaults>
</compile_context>

<pallas_src>
import jax
import jax.numpy as jnp
from jax import lax
from jax.experimental import pallas as pl
from jax.experimental.pallas import tpu as pltpu

REL_NAMES = ["DDI", "DPI", "PPI"]
# canonical etypes: rel -> (src node type, dst node type)
CANON = {
    "DDI": ("drug", "drug"),
    "DPI": ("drug", "protein"),
    "PPI": ("protein", "protein"),
}
NTYPES = ["drug", "protein"]
NTYPE_IDX = {"drug": 0, "protein": 1}
# per-relation (src type index, dst type index) — static metadata baked into the kernel
REL_SRC_DST = [(NTYPE_IDX[CANON[r][0]], NTYPE_IDX[CANON[r][1]]) for r in REL_NAMES]
# scoring groups: 3 relations on pos_g followed by 3 relations on neg_g
GROUP_SRC_DST = REL_SRC_DST + REL_SRC_DST

# Static layout of the batched gathers: for each node type, the ordered list of
# (group, side) pairs that read that type's h; and per group, where its u/v
# columns live inside the per-type gathered slab.
TYPE_READS = [[], []]              # ntype -> list of (group, side); side 0=u, 1=v
GROUP_SLOTS = []                   # group -> ((u_type, u_pos), (v_type, v_pos))
for _g, (_s, _d) in enumerate(GROUP_SRC_DST):
    _up = len(TYPE_READS[_s]); TYPE_READS[_s].append((_g, 0))
    _vp = len(TYPE_READS[_d]); TYPE_READS[_d].append((_g, 1))
    GROUP_SLOTS.append(((_s, _up), (_d, _vp)))
NREADS = max(len(r) for r in TYPE_READS)   # 6 for this relation set

SUBLANE = 8
LANE = 128


def _round_up(x, m):
    return ((x + m - 1) // m) * m


# ---------------------------------------------------------------------------
# Fused Pallas kernel: HeteroGraphConv + u_dot_v scoring in one launch
# ---------------------------------------------------------------------------
def _fused_forward_kernel(a_ref, xt_ref, wt_ref, bt_ref, idx_ref, out_ref):
    """Feature-major layout (features on sublanes, nodes/edges on lanes).

    a_ref  : [3, NPAD, NPAD]      bf16  A per relation (rows = dst, cols = src), zero-padded
    xt_ref : [2, F_in, NPAD]      bf16  X^T per node type (drug, protein), zero-padded
    wt_ref : [3, F_out, F_in]     f32   W^T per relation
    bt_ref : [3, F_out, 1]        f32   b^T per relation
    idx_ref: [2, NREADS*E_pad]    int32 per-node-type concatenated edge-endpoint ids
    out_ref: [8, E_pad]           f32   rows 0..5 = lane-dense score rows, rows 6..7 = pad
    """
    npad = a_ref.shape[1]
    e_tot = idx_ref.shape[1]
    e_pad = out_ref.shape[1]
    f_in = xt_ref.shape[1]
    f_out = wt_ref.shape[1]

    nt = (((1,), (1,)), ((), ()))                 # contract last dims: lhs @ rhs^T
    ones_row = jnp.ones((1, npad), jnp.bfloat16)

    # --- HeteroGraphConv: h^T per dst node type, summed over relations ------
    h_t = [None, None]                            # dst ntype -> [F_out, NPAD] f32
    for r, (src_i, dst_i) in enumerate(REL_SRC_DST):
        a = a_ref[r]                              # [NPAD_dst, NPAD_src] bf16 (exact 0/1)
        # norm='right': in-degree per dst node, as a lane-dense row via a ones-row
        # NT matmul (bf16 x bf16 with f32 accumulation is exact for 0/1 counts).
        deg = lax.dot_general(ones_row, a, nt,
                              preferred_element_type=jnp.float32)       # [1, NPAD_dst]
        inv_deg = 1.0 / jnp.maximum(deg, 1.0)                           # exact f32
        if f_out < f_in:
            # Carry the smaller feature dim through the O(NPAD^2) matmul.
            z = jnp.dot(wt_ref[r], xt_ref[src_i].astype(jnp.float32),
                        preferred_element_type=jnp.float32)             # [F_out, NPAD_src]
            hr = lax.dot_general(z.astype(jnp.bfloat16), a, nt,
                                 preferred_element_type=jnp.float32)    # [F_out, NPAD_dst]
            hr = hr * inv_deg + bt_ref[r]
        else:
            # (A_norm @ X)^T = (X^T contracted with A over src) scaled per dst column.
            y = lax.dot_general(xt_ref[src_i], a, nt,
                                preferred_element_type=jnp.float32)     # [F_in, NPAD_dst]
            y = y * inv_deg
            hr = jnp.dot(wt_ref[r], y,
                         preferred_element_type=jnp.float32) + bt_ref[r]  # [F_out, NPAD]
        h_t[dst_i] = hr if h_t[dst_i] is None else h_t[dst_i] + hr

    # --- ScorePredictor: batched one-hot MXU gather, one wide matmul per ntype
    node_iota = lax.broadcasted_iota(jnp.int32, (npad, 1), 0)           # [NPAD, 1]
    gathered = []
    for t in range(len(NTYPES)):
        one_hot = (node_iota == idx_ref[t:t + 1, :]).astype(jnp.bfloat16)  # [NPAD, e_tot]
        gathered.append(jnp.dot(h_t[t].astype(jnp.bfloat16), one_hot,
                                preferred_element_type=jnp.float32))    # [F_out, e_tot]

    # per-group u·v rows, assembled into one [8, E_pad] slab and stored once
    rows = []
    for g in range(len(GROUP_SRC_DST)):
        (ut, up), (vt, vp) = GROUP_SLOTS[g]
        xu = gathered[ut][:, up * e_pad:(up + 1) * e_pad]               # [F_out, E_pad]
        xv = gathered[vt][:, vp * e_pad:(vp + 1) * e_pad]
        rows.append(jnp.sum(xu * xv, axis=0, keepdims=True))            # [1, E_pad]
    rows.append(jnp.zeros((out_ref.shape[0] - len(rows), e_pad), jnp.float32))
    out_ref[...] = jnp.concatenate(rows, axis=0)                        # one unmasked store


def fused_forward(a_stack, xt_stack, wt_stack, bt_stack, idx, e_pad):
    vmem = lambda: pl.BlockSpec(memory_space=pltpu.MemorySpace.VMEM)
    return pl.pallas_call(
        _fused_forward_kernel,
        out_shape=jax.ShapeDtypeStruct((SUBLANE, e_pad), jnp.float32),
        in_specs=[vmem() for _ in range(5)],
        out_specs=vmem(),
        compiler_params=pltpu.CompilerParams(vmem_limit_bytes=64 * 1024 * 1024),
    )(a_stack, xt_stack, wt_stack, bt_stack, idx)


# ---------------------------------------------------------------------------
# Model wrapper (glue: parameter setup, padding, output slicing)
# ---------------------------------------------------------------------------
class Model:
    def __init__(self, in_features, out_features, key):
        self.in_features = in_features
        self.out_features = out_features
        self.w, self.b = [], []
        for i, rel in enumerate(REL_NAMES):
            k = jax.random.fold_in(key, i)
            # deterministic synthetic init; DGL GraphConv bias init is zeros
            w = 0.1 * jax.random.normal(k, (in_features, out_features), jnp.float32)
            self.w.append(w)
            self.b.append(jnp.zeros((out_features,), jnp.float32))
        # parameters stored pre-transposed for the feature-major kernel layout
        self.wt = jnp.stack([w.T for w in self.w])          # [3, F_out, F_in] f32
        self.bt = jnp.stack([b[:, None] for b in self.b])   # [3, F_out, 1]   f32

    def __call__(self, pos_g, neg_g, blocks, x):
        block0 = blocks[0]
        n_nodes = {t: int(x[t].shape[0]) for t in NTYPES}
        npad = _round_up(max(n_nodes.values()), LANE)        # lane-aligned node padding

        # node features, zero-padded, transposed, cast to bf16: [2, F_in, NPAD]
        xt = jnp.stack([
            jnp.pad(x[t].astype(jnp.float32), ((0, npad - n_nodes[t]), (0, 0))).T
            for t in NTYPES
        ]).astype(jnp.bfloat16)

        # per-relation adjacency as produced ([n_dst, n_src]); NO host transpose.
        a = jnp.stack([
            jnp.pad(block0[rel].astype(jnp.float32),
                    ((0, npad - n_nodes[CANON[rel][1]]),
                     (0, npad - n_nodes[CANON[rel][0]])))
            for rel in REL_NAMES
        ]).astype(jnp.bfloat16)                              # [3, NPAD_dst, NPAD_src]

        # edge lists for all 6 (graph, relation) groups, laid out per node type:
        # row t = concat over TYPE_READS[t] of that read's endpoint ids, each padded
        # to E_pad lanes.
        groups = [(pos_g, rel) for rel in REL_NAMES] + [(neg_g, rel) for rel in REL_NAMES]
        n_edges = [int(g[rel][0].shape[0]) for g, rel in groups]
        e_pad = max(LANE, _round_up(max(n_edges), LANE))
        idx_rows = []
        for t in range(len(NTYPES)):
            segs = []
            for (g, side) in TYPE_READS[t]:
                graph, rel = groups[g]
                ids = graph[rel][side]
                segs.append(jnp.pad(ids.astype(jnp.int32), (0, e_pad - int(ids.shape[0]))))
            while len(segs) < NREADS:                        # defensive: equal-width rows
                segs.append(jnp.zeros((e_pad,), jnp.int32))
            idx_rows.append(jnp.concatenate(segs))
        idx = jnp.stack(idx_rows)                            # [2, NREADS*E_pad]

        scores = fused_forward(a, xt, self.wt, self.bt, idx, e_pad)   # [8, E_pad]

        pos_scores, neg_scores = {}, {}
        for gi, ((_, rel), ne) in enumerate(zip(groups, n_edges)):
            col = scores[gi, :ne].reshape(ne, 1)   # back to DGL u_dot_v shape [E, 1]
            (pos_scores if gi < len(REL_NAMES) else neg_scores)[rel] = col
        return pos_scores, neg_scores


# ---------------------------------------------------------------------------
# Pure-JAX f32 reference (for correctness check)
# ---------------------------------------------------------------------------
def _reference_forward(model, pos_g, neg_g, block0, x):
    h = {"drug": None, "protein": None}
    for r, rel in enumerate(REL_NAMES):
        src_t, dst_t = CANON[rel]
        adj = block0[rel].astype(jnp.float32)
        deg = jnp.maximum(adj.sum(axis=1, keepdims=True), 1.0)
        hr = ((adj / deg) @ x[src_t]) @ model.w[r] + model.b[r]
        h[dst_t] = hr if h[dst_t] is None else h[dst_t] + hr

    def score(g):
        return {rel: jnp.sum(h[CANON[rel][0]][s] * h[CANON[rel][1]][d],
                             axis=-1, keepdims=True)
                for rel, (s, d) in g.items()}

    return score(pos_g), score(neg_g)


# ---------------------------------------------------------------------------
# Synthetic graph construction + driver
# ---------------------------------------------------------------------------
def _make_adj(key, n_dst, n_src, p=0.4):
    adj = (jax.random.uniform(key, (n_dst, n_src)) < p).astype(jnp.float32)
    # guarantee every dst node has at least one in-edge (avoid 0-in-degree)
    eye_like = jnp.zeros((n_dst, n_src)).at[jnp.arange(n_dst), jnp.arange(n_dst) % n_src].set(1.0)
    return jnp.maximum(adj, eye_like)


def _make_edges(key, n_edges, n_src, n_dst):
    k1, k2 = jax.random.split(key)
    src = jax.random.randint(k1, (n_edges,), 0, n_src)
    dst = jax.random.randint(k2, (n_edges,), 0, n_dst)
    return src, dst


if __name__ == "__main__":
    IN_F, OUT_F = 16, 32
    N_DRUG, N_PROT = 8, 8
    N_EDGES = 16

    key = jax.random.PRNGKey(0)
    k_model, k_x, k_blk, k_pos, k_neg = jax.random.split(key, 5)

    # node features per node type
    kx_d, kx_p = jax.random.split(k_x)
    x = {
        "drug": jax.random.normal(kx_d, (N_DRUG, IN_F), jnp.float32),
        "protein": jax.random.normal(kx_p, (N_PROT, IN_F), jnp.float32),
    }

    # blocks[0]: message-passing graph per relation, as dense [n_dst, n_src] adjacency
    kb = jax.random.split(k_blk, 3)
    n_nodes = {"drug": N_DRUG, "protein": N_PROT}
    block0 = {
        rel: _make_adj(kb[i], n_nodes[CANON[rel][1]], n_nodes[CANON[rel][0]])
        for i, rel in enumerate(REL_NAMES)
    }

    # pos_g / neg_g: per-relation edge lists (src ids, dst ids)
    kp = jax.random.split(k_pos, 3)
    kn = jax.random.split(k_neg, 3)
    pos_g = {
        rel: _make_edges(kp[i], N_EDGES, n_nodes[CANON[rel][0]], n_nodes[CANON[rel][1]])
        for i, rel in enumerate(REL_NAMES)
    }
    neg_g = {
        rel: _make_edges(kn[i], N_EDGES, n_nodes[CANON[rel][0]], n_nodes[CANON[rel][1]])
        for i, rel in enumerate(REL_NAMES)
    }

    model = Model(IN_F, OUT_F, k_model)
    pos_scores, neg_scores = model(pos_g, neg_g, [block0], x)
    ref_pos, ref_neg = _reference_forward(model, pos_g, neg_g, block0, x)

    for got, ref in ((pos_scores, ref_pos), (neg_scores, ref_neg)):
        for rel in REL_NAMES:
            jax.block_until_ready(got[rel])
            assert got[rel].shape == (N_EDGES, 1)
            # tolerance covers the bf16 MXU operand path (A/one-hots exact; X, h bf16)
            assert jnp.allclose(got[rel], ref[rel], rtol=3e-2, atol=3e-2), rel

    print("KERNEL_OK")
</pallas_src>

<mosaic_0001>
module attributes {stable_mosaic.version = 11 : i64} {
  func.func @_fused_forward_kernel(%arg0: memref<3x128x128xbf16, #tpu.memory_space<vmem>>, %arg1: memref<2x16x128xbf16, #tpu.memory_space<vmem>>, %arg2: memref<3x32x16xf32, #tpu.memory_space<vmem>>, %arg3: memref<3x32x1xf32, #tpu.memory_space<vmem>>, %arg4: memref<2x768xi32, #tpu.memory_space<vmem>>, %arg5: memref<8x128xf32, #tpu.memory_space<vmem>>) attributes {dimension_semantics = [], scalar_prefetch = 0 : i64, scratch_operands = 0 : i64, tpu.core_type = #tpu.core_type<tc>} {
    %cst = arith.constant 1.000000e+00 : bf16
    %0 = vector.broadcast %cst : bf16 to vector<1x128xbf16>
    %c0 = arith.constant 0 : index
    %c0_0 = arith.constant 0 : index
    %c0_1 = arith.constant 0 : index
    %1 = vector.load %arg0[%c0, %c0_0, %c0_1] : memref<3x128x128xbf16, #tpu.memory_space<vmem>>, vector<1x128x128xbf16>
    %2 = vector.shape_cast %1 : vector<1x128x128xbf16> to vector<128x128xbf16>
    %cst_2 = arith.constant dense<0.000000e+00> : vector<1x128xf32>
    %3 = tpu.matmul %0, %2, %cst_2 {dimension_numbers = #tpu.dot_dimension_numbers<[1], [1], [0], [0], [0, 0, 1, 0], [], []>} : vector<1x128xbf16>, vector<128x128xbf16>, vector<1x128xf32> -> vector<1x128xf32>
    %cst_3 = arith.constant 1.000000e+00 : f32
    %4 = vector.broadcast %cst_3 : f32 to vector<1x128xf32>
    %5 = arith.maximumf %3, %4 : vector<1x128xf32>
    %cst_4 = arith.constant 1.000000e+00 : f32
    %6 = vector.broadcast %cst_4 : f32 to vector<1x128xf32>
    %7 = arith.divf %6, %5 : vector<1x128xf32>
    %c0_5 = arith.constant 0 : index
    %c0_6 = arith.constant 0 : index
    %c0_7 = arith.constant 0 : index
    %8 = vector.load %arg1[%c0_5, %c0_6, %c0_7] : memref<2x16x128xbf16, #tpu.memory_space<vmem>>, vector<1x16x128xbf16>
    %9 = vector.shape_cast %8 : vector<1x16x128xbf16> to vector<16x128xbf16>
    %cst_8 = arith.constant dense<0.000000e+00> : vector<16x128xf32>
    %10 = tpu.matmul %9, %2, %cst_8 {dimension_numbers = #tpu.dot_dimension_numbers<[1], [1], [0], [0], [0, 0, 1, 0], [], []>} : vector<16x128xbf16>, vector<128x128xbf16>, vector<16x128xf32> -> vector<16x128xf32>
    %11 = vector.broadcast %7 : vector<1x128xf32> to vector<16x128xf32>
    %12 = arith.mulf %10, %11 : vector<16x128xf32>
    %c0_9 = arith.constant 0 : index
    %c0_10 = arith.constant 0 : index
    %c0_11 = arith.constant 0 : index
    %13 = vector.load %arg2[%c0_9, %c0_10, %c0_11] : memref<3x32x16xf32, #tpu.memory_space<vmem>>, vector<1x32x16xf32>
    %14 = vector.shape_cast %13 : vector<1x32x16xf32> to vector<32x16xf32>
    %cst_12 = arith.constant dense<0.000000e+00> : vector<32x128xf32>
    %15 = tpu.matmul %14, %12, %cst_12 {dimension_numbers = #tpu.dot_dimension_numbers<[1], [0], [0], [1], [0, 0, 1, 1], [], []>} : vector<32x16xf32>, vector<16x128xf32>, vector<32x128xf32> -> vector<32x128xf32>
    %c0_13 = arith.constant 0 : index
    %c0_14 = arith.constant 0 : index
    %c0_15 = arith.constant 0 : index
    %16 = vector.load %arg3[%c0_13, %c0_14, %c0_15] : memref<3x32x1xf32, #tpu.memory_space<vmem>>, vector<1x32x1xf32>
    %17 = vector.shape_cast %16 : vector<1x32x1xf32> to vector<32x1xf32>
    %18 = vector.broadcast %17 : vector<32x1xf32> to vector<32x128xf32>
    %19 = arith.addf %15, %18 : vector<32x128xf32>
    %c1 = arith.constant 1 : index
    %c0_16 = arith.constant 0 : index
    %c0_17 = arith.constant 0 : index
    %20 = vector.load %arg0[%c1, %c0_16, %c0_17] : memref<3x128x128xbf16, #tpu.memory_space<vmem>>, vector<1x128x128xbf16>
    %21 = vector.shape_cast %20 : vector<1x128x128xbf16> to vector<128x128xbf16>
    %cst_18 = arith.constant dense<0.000000e+00> : vector<1x128xf32>
    %22 = tpu.matmul %0, %21, %cst_18 {dimension_numbers = #tpu.dot_dimension_numbers<[1], [1], [0], [0], [0, 0, 1, 0], [], []>} : vector<1x128xbf16>, vector<128x128xbf16>, vector<1x128xf32> -> vector<1x128xf32>
    %cst_19 = arith.constant 1.000000e+00 : f32
    %23 = vector.broadcast %cst_19 : f32 to vector<1x128xf32>
    %24 = arith.maximumf %22, %23 : vector<1x128xf32>
    %cst_20 = arith.constant 1.000000e+00 : f32
    %25 = vector.broadcast %cst_20 : f32 to vector<1x128xf32>
    %26 = arith.divf %25, %24 : vector<1x128xf32>
    %c0_21 = arith.constant 0 : index
    %c0_22 = arith.constant 0 : index
    %c0_23 = arith.constant 0 : index
    %27 = vector.load %arg1[%c0_21, %c0_22, %c0_23] : memref<2x16x128xbf16, #tpu.memory_space<vmem>>, vector<1x16x128xbf16>
    %28 = vector.shape_cast %27 : vector<1x16x128xbf16> to vector<16x128xbf16>
    %cst_24 = arith.constant dense<0.000000e+00> : vector<16x128xf32>
    %29 = tpu.matmul %28, %21, %cst_24 {dimension_numbers = #tpu.dot_dimension_numbers<[1], [1], [0], [0], [0, 0, 1, 0], [], []>} : vector<16x128xbf16>, vector<128x128xbf16>, vector<16x128xf32> -> vector<16x128xf32>
    %30 = vector.broadcast %26 : vector<1x128xf32> to vector<16x128xf32>
    %31 = arith.mulf %29, %30 : vector<16x128xf32>
    %c1_25 = arith.constant 1 : index
    %c0_26 = arith.constant 0 : index
    %c0_27 = arith.constant 0 : index
    %32 = vector.load %arg2[%c1_25, %c0_26, %c0_27] : memref<3x32x16xf32, #tpu.memory_space<vmem>>, vector<1x32x16xf32>
    %33 = vector.shape_cast %32 : vector<1x32x16xf32> to vector<32x16xf32>
    %cst_28 = arith.constant dense<0.000000e+00> : vector<32x128xf32>
    %34 = tpu.matmul %33, %31, %cst_28 {dimension_numbers = #tpu.dot_dimension_numbers<[1], [0], [0], [1], [0, 0, 1, 1], [], []>} : vector<32x16xf32>, vector<16x128xf32>, vector<32x128xf32> -> vector<32x128xf32>
    %c1_29 = arith.constant 1 : index
    %c0_30 = arith.constant 0 : index
    %c0_31 = arith.constant 0 : index
    %35 = vector.load %arg3[%c1_29, %c0_30, %c0_31] : memref<3x32x1xf32, #tpu.memory_space<vmem>>, vector<1x32x1xf32>
    %36 = vector.shape_cast %35 : vector<1x32x1xf32> to vector<32x1xf32>
    %37 = vector.broadcast %36 : vector<32x1xf32> to vector<32x128xf32>
    %38 = arith.addf %34, %37 : vector<32x128xf32>
    %c2 = arith.constant 2 : index
    %c0_32 = arith.constant 0 : index
    %c0_33 = arith.constant 0 : index
    %39 = vector.load %arg0[%c2, %c0_32, %c0_33] : memref<3x128x128xbf16, #tpu.memory_space<vmem>>, vector<1x128x128xbf16>
    %40 = vector.shape_cast %39 : vector<1x128x128xbf16> to vector<128x128xbf16>
    %cst_34 = arith.constant dense<0.000000e+00> : vector<1x128xf32>
    %41 = tpu.matmul %0, %40, %cst_34 {dimension_numbers = #tpu.dot_dimension_numbers<[1], [1], [0], [0], [0, 0, 1, 0], [], []>} : vector<1x128xbf16>, vector<128x128xbf16>, vector<1x128xf32> -> vector<1x128xf32>
    %cst_35 = arith.constant 1.000000e+00 : f32
    %42 = vector.broadcast %cst_35 : f32 to vector<1x128xf32>
    %43 = arith.maximumf %41, %42 : vector<1x128xf32>
    %cst_36 = arith.constant 1.000000e+00 : f32
    %44 = vector.broadcast %cst_36 : f32 to vector<1x128xf32>
    %45 = arith.divf %44, %43 : vector<1x128xf32>
    %c1_37 = arith.constant 1 : index
    %c0_38 = arith.constant 0 : index
    %c0_39 = arith.constant 0 : index
    %46 = vector.load %arg1[%c1_37, %c0_38, %c0_39] : memref<2x16x128xbf16, #tpu.memory_space<vmem>>, vector<1x16x128xbf16>
    %47 = vector.shape_cast %46 : vector<1x16x128xbf16> to vector<16x128xbf16>
    %cst_40 = arith.constant dense<0.000000e+00> : vector<16x128xf32>
    %48 = tpu.matmul %47, %40, %cst_40 {dimension_numbers = #tpu.dot_dimension_numbers<[1], [1], [0], [0], [0, 0, 1, 0], [], []>} : vector<16x128xbf16>, vector<128x128xbf16>, vector<16x128xf32> -> vector<16x128xf32>
    %49 = vector.broadcast %45 : vector<1x128xf32> to vector<16x128xf32>
    %50 = arith.mulf %48, %49 : vector<16x128xf32>
    %c2_41 = arith.constant 2 : index
    %c0_42 = arith.constant 0 : index
    %c0_43 = arith.constant 0 : index
    %51 = vector.load %arg2[%c2_41, %c0_42, %c0_43] : memref<3x32x16xf32, #tpu.memory_space<vmem>>, vector<1x32x16xf32>
    %52 = vector.shape_cast %51 : vector<1x32x16xf32> to vector<32x16xf32>
    %cst_44 = arith.constant dense<0.000000e+00> : vector<32x128xf32>
    %53 = tpu.matmul %52, %50, %cst_44 {dimension_numbers = #tpu.dot_dimension_numbers<[1], [0], [0], [1], [0, 0, 1, 1], [], []>} : vector<32x16xf32>, vector<16x128xf32>, vector<32x128xf32> -> vector<32x128xf32>
    %c2_45 = arith.constant 2 : index
    %c0_46 = arith.constant 0 : index
    %c0_47 = arith.constant 0 : index
    %54 = vector.load %arg3[%c2_45, %c0_46, %c0_47] : memref<3x32x1xf32, #tpu.memory_space<vmem>>, vector<1x32x1xf32>
    %55 = vector.shape_cast %54 : vector<1x32x1xf32> to vector<32x1xf32>
    %56 = vector.broadcast %55 : vector<32x1xf32> to vector<32x128xf32>
    %57 = arith.addf %53, %56 : vector<32x128xf32>
    %58 = arith.addf %38, %57 : vector<32x128xf32>
    %59 = tpu.iota {dimensions = array<i32: 0>} : vector<128x1xi32>
    %c0_48 = arith.constant 0 : index
    %c0_49 = arith.constant 0 : index
    %60 = vector.load %arg4[%c0_48, %c0_49] : memref<2x768xi32, #tpu.memory_space<vmem>>, vector<1x768xi32>
    %61 = vector.broadcast %59 : vector<128x1xi32> to vector<128x768xi32>
    %62 = vector.broadcast %60 : vector<1x768xi32> to vector<128x768xi32>
    %63 = arith.cmpi eq, %61, %62 : vector<128x768xi32>
    %64 = arith.extui %63 : vector<128x768xi1> to vector<128x768xi32>
    %65 = arith.sitofp %64 : vector<128x768xi32> to vector<128x768xf32>
    %66 = arith.truncf %65 : vector<128x768xf32> to vector<128x768xbf16>
    %67 = arith.truncf %19 : vector<32x128xf32> to vector<32x128xbf16>
    %cst_50 = arith.constant dense<0.000000e+00> : vector<32x768xf32>
    %68 = tpu.matmul %67, %66, %cst_50 {dimension_numbers = #tpu.dot_dimension_numbers<[1], [0], [0], [1], [0, 0, 1, 1], [], []>} : vector<32x128xbf16>, vector<128x768xbf16>, vector<32x768xf32> -> vector<32x768xf32>
    %c1_51 = arith.constant 1 : index
    %c0_52 = arith.constant 0 : index
    %69 = vector.load %arg4[%c1_51, %c0_52] : memref<2x768xi32, #tpu.memory_space<vmem>>, vector<1x768xi32>
    %70 = vector.broadcast %59 : vector<128x1xi32> to vector<128x768xi32>
    %71 = vector.broadcast %69 : vector<1x768xi32> to vector<128x768xi32>
    %72 = arith.cmpi eq, %70, %71 : vector<128x768xi32>
    %73 = arith.extui %72 : vector<128x768xi1> to vector<128x768xi32>
    %74 = arith.sitofp %73 : vector<128x768xi32> to vector<128x768xf32>
    %75 = arith.truncf %74 : vector<128x768xf32> to vector<128x768xbf16>
    %76 = arith.truncf %58 : vector<32x128xf32> to vector<32x128xbf16>
    %cst_53 = arith.constant dense<0.000000e+00> : vector<32x768xf32>
    %77 = tpu.matmul %76, %75, %cst_53 {dimension_numbers = #tpu.dot_dimension_numbers<[1], [0], [0], [1], [0, 0, 1, 1], [], []>} : vector<32x128xbf16>, vector<128x768xbf16>, vector<32x768xf32> -> vector<32x768xf32>
    %78 = vector.extract_strided_slice %68 {offsets = [0, 0], sizes = [32, 128], strides = [1, 1]} : vector<32x768xf32> to vector<32x128xf32>
    %79 = vector.extract_strided_slice %68 {offsets = [0, 128], sizes = [32, 128], strides = [1, 1]} : vector<32x768xf32> to vector<32x128xf32>
    %80 = arith.mulf %78, %79 : vector<32x128xf32>
    %cst_54 = arith.constant dense<0.000000e+00> : vector<128xf32>
    %81 = vector.multi_reduction <add>, %80, %cst_54 [0] : vector<32x128xf32> to vector<128xf32>
    %82 = vector.shape_cast %81 : vector<128xf32> to vector<1x128xf32>
    %83 = vector.extract_strided_slice %68 {offsets = [0, 256], sizes = [32, 128], strides = [1, 1]} : vector<32x768xf32> to vector<32x128xf32>
    %84 = vector.extract_strided_slice %77 {offsets = [0, 0], sizes = [32, 128], strides = [1, 1]} : vector<32x768xf32> to vector<32x128xf32>
    %85 = arith.mulf %83, %84 : vector<32x128xf32>
    %cst_55 = arith.constant dense<0.000000e+00> : vector<128xf32>
    %86 = vector.multi_reduction <add>, %85, %cst_55 [0] : vector<32x128xf32> to vector<128xf32>
    %87 = vector.shape_cast %86 : vector<128xf32> to vector<1x128xf32>
    %88 = vector.extract_strided_slice %77 {offsets = [0, 128], sizes = [32, 128], strides = [1, 1]} : vector<32x768xf32> to vector<32x128xf32>
    %89 = vector.extract_strided_slice %77 {offsets = [0, 256], sizes = [32, 128], strides = [1, 1]} : vector<32x768xf32> to vector<32x128xf32>
    %90 = arith.mulf %88, %89 : vector<32x128xf32>
    %cst_56 = arith.constant dense<0.000000e+00> : vector<128xf32>
    %91 = vector.multi_reduction <add>, %90, %cst_56 [0] : vector<32x128xf32> to vector<128xf32>
    %92 = vector.shape_cast %91 : vector<128xf32> to vector<1x128xf32>
    %93 = vector.extract_strided_slice %68 {offsets = [0, 384], sizes = [32, 128], strides = [1, 1]} : vector<32x768xf32> to vector<32x128xf32>
    %94 = vector.extract_strided_slice %68 {offsets = [0, 512], sizes = [32, 128], strides = [1, 1]} : vector<32x768xf32> to vector<32x128xf32>
    %95 = arith.mulf %93, %94 : vector<32x128xf32>
    %cst_57 = arith.constant dense<0.000000e+00> : vector<128xf32>
    %96 = vector.multi_reduction <add>, %95, %cst_57 [0] : vector<32x128xf32> to vector<128xf32>
    %97 = vector.shape_cast %96 : vector<128xf32> to vector<1x128xf32>
    %98 = vector.extract_strided_slice %68 {offsets = [0, 640], sizes = [32, 128], strides = [1, 1]} : vector<32x768xf32> to vector<32x128xf32>
    %99 = vector.extract_strided_slice %77 {offsets = [0, 384], sizes = [32, 128], strides = [1, 1]} : vector<32x768xf32> to vector<32x128xf32>
    %100 = arith.mulf %98, %99 : vector<32x128xf32>
    %cst_58 = arith.constant dense<0.000000e+00> : vector<128xf32>
    %101 = vector.multi_reduction <add>, %100, %cst_58 [0] : vector<32x128xf32> to vector<128xf32>
    %102 = vector.shape_cast %101 : vector<128xf32> to vector<1x128xf32>
    %103 = vector.extract_strided_slice %77 {offsets = [0, 512], sizes = [32, 128], strides = [1, 1]} : vector<32x768xf32> to vector<32x128xf32>
    %104 = vector.extract_strided_slice %77 {offsets = [0, 640], sizes = [32, 128], strides = [1, 1]} : vector<32x768xf32> to vector<32x128xf32>
    %105 = arith.mulf %103, %104 : vector<32x128xf32>
    %cst_59 = arith.constant dense<0.000000e+00> : vector<128xf32>
    %106 = vector.multi_reduction <add>, %105, %cst_59 [0] : vector<32x128xf32> to vector<128xf32>
    %107 = vector.shape_cast %106 : vector<128xf32> to vector<1x128xf32>
    %cst_60 = arith.constant 0.000000e+00 : f32
    %108 = vector.broadcast %cst_60 : f32 to vector<2x128xf32>
    %109 = tpu.concatenate %82, %87, %92, %97, %102, %107, %108 in 0 : vector<1x128xf32>, vector<1x128xf32>, vector<1x128xf32>, vector<1x128xf32>, vector<1x128xf32>, vector<1x128xf32>, vector<2x128xf32> -> vector<8x128xf32>
    %c0_61 = arith.constant 0 : index
    %c0_62 = arith.constant 0 : index
    %110 = vector.load %arg5[%c0_61, %c0_62] : memref<8x128xf32, #tpu.memory_space<vmem>>, vector<8x128xf32>
    tpu.vector_store %arg5[%c0_61, %c0_62], %109 {strides = array<i32>} : memref<8x128xf32, #tpu.memory_space<vmem>>, vector<8x128xf32>,
    return
  }
}

</mosaic_0001>

<llo_original>
// kernel: tpu_custom_call.1
$region0: #{tpu_custom_call.1}
  #allocation0 [shape = 'u32[]', space=smem, size = 0x4, offset = 0x4, fixed_abs, tag = 'smem constant byte address 0x4 - core index']
  #allocation1 [shape = 'u32[72,128]{1,0:T(1,128)}', space=vmem, size = 0x9000, scoped, tag = 'internal scratch']
  %s0 = inlined_call_operand.vmem [shape: bf16[3,128,128], index: 0, kind: input, shape index: {}]
  %s1 = inlined_call_operand.vmem [shape: bf16[2,16,128], index: 1, kind: input, shape index: {}]
  %s2 = inlined_call_operand.vmem [shape: f32[3,32,16], index: 2, kind: input, shape index: {}]
  %s3 = inlined_call_operand.vmem [shape: f32[3,32,1], index: 3, kind: input, shape index: {}]
  %s4 = inlined_call_operand.vmem [shape: s32[2,768], index: 4, kind: input, shape index: {}]
  %s5 = inlined_call_operand.hbm [shape: f32[8,128], index: 5, kind: output, shape index: {}]
  %s6 = sld [smem:[#allocation0]]
  $region30: #{tpu_custom_call.1} parent=0
    _
  %s8 = ssub.s32 1, %s6
  %s9 = scalar_select 0, %s8, %s6
  $region1: #{tpu_custom_call.1} parent=0
    #allocation2 [shape = 'u8[4096]{0}', space=vmem, size = 0x1000, scoped, tag = 'output window, operand 0, single buffered']
    #allocation3 [shape = 's32[1]{0}', space=sflag, size = 0x4, scoped, tag = 'scoped memory for tpu_custom_call.1']
    %10 = vsyncpa [#allocation3], 0
    // Predicated region
    $region2: #{tpu_custom_call.1} parent=1 // pred_check
      _
    $region3: #{tpu_custom_call.1} parent=1 // pred_check_branch
      %12 = sbr.rel (0) target = $region5
    $region4: #{tpu_custom_call.1} parent=1 // pred_region
      _
    $region5: #{tpu_custom_call.1} parent=1 // pred_fallthru
      _
    // Predicated region
    $region6: #{tpu_custom_call.1} parent=1 // pred_check
      _
    $region7: #{tpu_custom_call.1} parent=1 // pred_check_branch
      %14 = sbr.rel (0) target = $region9
    $region8: #{tpu_custom_call.1} parent=1 // pred_region
      _
    $region9: #{tpu_custom_call.1} parent=1 // pred_fallthru
      _
    // Predicated region
    $region10: #{tpu_custom_call.1} parent=1 // pred_check
      _
    $region11: #{tpu_custom_call.1} parent=1 // pred_check_branch
      %16 = sbr.rel (0) target = $region13
    $region12: #{tpu_custom_call.1} parent=1 // pred_region
      _
    $region13: #{tpu_custom_call.1} parent=1 // pred_fallthru
      _
    // Predicated region
    $region14: #{tpu_custom_call.1} parent=1 // pred_check
      _
    $region15: #{tpu_custom_call.1} parent=1 // pred_check_branch
      %18 = sbr.rel (0) target = $region17
    $region16: #{tpu_custom_call.1} parent=1 // pred_region
      _
    $region17: #{tpu_custom_call.1} parent=1 // pred_fallthru
      _
    // Predicated region
    $region18: #{tpu_custom_call.1} parent=1 // pred_check
      _
    $region19: #{tpu_custom_call.1} parent=1 // pred_check_branch
      %20 = sbr.rel (0) target = $region21
    $region20: #{tpu_custom_call.1} parent=1 // pred_region
      _
    $region21: #{tpu_custom_call.1} parent=1 // pred_fallthru
      _
    %v22 = vld [vmem:[%s0] sm:$0xf]
    %v23 = vld [vmem:[%s0 + $0x4] sm:$0xf]
    %v24 = vld [vmem:[%s0 + $0x8] sm:$0xf]
    %v25 = vld [vmem:[%s0 + $0xc] sm:$0xf]
    %v26 = vld [vmem:[%s0 + $0x10] sm:$0xf]
    %v27 = vld [vmem:[%s0 + $0x14] sm:$0xf]
    %v28 = vld [vmem:[%s0 + $0x18] sm:$0xf]
    %v29 = vld [vmem:[%s0 + $0x1c] sm:$0xf]
    %v30 = vld [vmem:[%s0 + $0x20] sm:$0xf]
    %v31 = vld [vmem:[%s0 + $0x24] sm:$0xf]
    %v32 = vld [vmem:[%s0 + $0x28] sm:$0xf]
    %v33 = vld [vmem:[%s0 + $0x2c] sm:$0xf]
    %v34 = vld [vmem:[%s0 + $0x30] sm:$0xf]
    %v35 = vld [vmem:[%s0 + $0x34] sm:$0xf]
    %v36 = vld [vmem:[%s0 + $0x38] sm:$0xf]
    %v37 = vld [vmem:[%s0 + $0x3c] sm:$0xf]
    %v54 = vunpack.c.l.b16 %v22
    %v55 = vunpack.c.l.b16 %v23
    %v56 = vunpack.c.l.b16 %v24
    %v57 = vunpack.c.l.b16 %v25
    %v58 = vunpack.c.l.b16 %v26
    %v59 = vunpack.c.l.b16 %v27
    %v60 = vunpack.c.l.b16 %v28
    %v61 = vunpack.c.l.b16 %v29
    %v62 = vunpack.c.l.b16 %v30
    %v63 = vunpack.c.l.b16 %v31
    %v64 = vunpack.c.l.b16 %v32
    %v65 = vunpack.c.l.b16 %v33
    %v66 = vunpack.c.l.b16 %v34
    %v67 = vunpack.c.l.b16 %v35
    %v68 = vunpack.c.l.b16 %v36
    %v69 = vunpack.c.l.b16 %v37
    %v70 = vpack.c.b16 %v55, %v54
    %v71 = vpack.c.b16 %v57, %v56
    %v72 = vpack.c.b16 %v59, %v58
    %v73 = vpack.c.b16 %v61, %v60
    %v74 = vpack.c.b16 %v63, %v62
    %v75 = vpack.c.b16 %v65, %v64
    %v76 = vpack.c.b16 %v67, %v66
    %v77 = vpack.c.b16 %v69, %v68
    %86 = vmatpush.bf16.xpose.msra.mxu0 %v77
    %87 = vmatpush.bf16.xpose.msra.mxu0 %v76
    %88 = vmatpush.bf16.xpose.msra.mxu0 %v75
    %89 = vmatpush.bf16.xpose.msra.mxu0 %v74
    %90 = vmatpush.bf16.xpose.msra.mxu0 %v73
    %91 = vmatpush.bf16.xpose.msra.mxu0 %v72
    %92 = vmatpush.bf16.xpose.msra.mxu0 %v71
    %93 = vmatpush.bf16.xpose.msra.mxu0 %v70
    %94 = vmatmul.bf16.gmra.mxu0 1065369472
    %v95 = vpop.f32.mrf.mxu0
    %v96 = vadd.f32 0.0, %v95
    %v97 = vpop.f32.mrf.mxu0
    %98 = vdwg.mxu0
    %v99 = vmax.f32 %v96, 1.0
    %v100 = vrcp.pop %v99
    %v101 = vmul.f32 %v99, %v100
    %v102 = vsub.f32 1.0, %v101
    %v103 = vmul.f32 %v100, %v102
    %v104 = vadd.f32 %v100, %v103
    %vm105 = vweird.f32 %v99
    %vm106 = vweird.f32 %v100
    %vm107 = vmor %vm105, %vm106
    %v108 = vsel %vm107, %v100, %v104
    %v109 = vand.u32 2147483647, %v99
    %vm110 = vcmp.eq.f32.partialorder %v109, 8.507059e+37
    %v111 = vand.u32 %v99, 2147483648
    %v112 = vor.u32 1.1754944e-38, %v111
    %v113 = vsel %vm110, %v112, %v108
    %v114 = vmul.f32 1.0, %v113
    %v115 = vld [vmem:[%s1] sm:$0xf]
    %v116 = vld [vmem:[%s1 + $0x4] sm:$0xf]
    %v119 = vunpack.c.l.b16 %v115
    %v120 = vunpack.c.l.b16 %v116
    %v121 = vpack.c.b16 %v120, %v119
    %123 = vmatpush.bf16.xpose.msra.mxu0 %v77
    %124 = vmatpush.bf16.xpose.msra.mxu0 %v76
    %125 = vmatpush.bf16.xpose.msra.mxu0 %v75
    %126 = vmatpush.bf16.xpose.msra.mxu0 %v74
    %127 = vmatpush.bf16.xpose.msra.mxu0 %v73
    %128 = vmatpush.bf16.xpose.msra.mxu0 %v72
    %129 = vmatpush.bf16.xpose.msra.mxu0 %v71
    %130 = vmatpush.bf16.xpose.msra.mxu0 %v70
    %131 = vmatmul.bf16.gmra.mxu0 %v121
    %v132 = vpop.f32.mrf.mxu0
    %v133 = vadd.f32 0.0, %v132
    %v134 = vpop.f32.mrf.mxu0
    %v135 = vadd.f32 0.0, %v134
    %136 = vdwg.mxu0
    %v137 = vperm.slane %v114, 0
    %v138 = vmul.f32 %v133, %v137
    %v139 = vmul.f32 %v135, %v137
    %v140 = vld [vmem:[%s2] sm:$0xff]
    %v141 = vld [vmem:[%s2 + $0x8] sm:$0xff]
    %v142 = vld [vmem:[%s2 + $0x10] sm:$0xff]
    %v143 = vld [vmem:[%s2 + $0x18] sm:$0xff]
    %v144 = vld [vmem:[%s3] sm:$0xff]
    %v145 = vld [vmem:[%s3 + $0x8] sm:$0xff]
    %v146 = vld [vmem:[%s3 + $0x10] sm:$0xff]
    %v147 = vld [vmem:[%s3 + $0x18] sm:$0xff]
    %149 = vset.pattern.permute.xlu0 0
    %150 = vperm.xlu0 %149, %v144
    %v151 = vpop.permute.xlu0 %150
    %154 = vset.pattern.permute.xlu0 0
    %155 = vperm.xlu0 %154, %v145
    %v156 = vpop.permute.xlu0 %155
    %159 = vset.pattern.permute.xlu0 0
    %160 = vperm.xlu0 %159, %v146
    %v161 = vpop.permute.xlu0 %160
    %164 = vset.pattern.permute.xlu0 0
    %165 = vperm.xlu0 %164, %v147
    %v166 = vpop.permute.xlu0 %165
    %vm168 = vcmask 130048
    %v170 = vsel %vm168, %v140, 0
    %v173 = vsel %vm168, %v141, 0
    %v176 = vsel %vm168, %v142, 0
    %v179 = vsel %vm168, %v143, 0
    %181 = vmatpush.msra.mxu0 0.0
    %182 = vmatpush.msra.mxu0 0.0
    %183 = vmatpush.msra.mxu0 0.0
    %184 = vmatpush.msra.mxu0 0.0
    %185 = vmatpush.msra.mxu0 0.0
    %186 = vmatpush.msra.mxu0 0.0
    %187 = vmatpush.msra.mxu0 0.0
    %188 = vmatpush.msra.mxu0 0.0
    %189 = vmatpush.msra.mxu0 0.0
    %190 = vmatpush.msra.mxu0 0.0
    %191 = vmatpush.msra.mxu0 0.0
    %192 = vmatpush.msra.mxu0 0.0
    %193 = vmatpush.msra.mxu0 0.0
    %194 = vmatpush.msra.mxu0 0.0
    %195 = vmatpush.msra.mxu0 %v139
    %196 = vmatpush.msra.mxu0 %v138
    %197 = vmatmul.f32.gmra.mxu0 %v170
    %v198 = vpop.f32.mrf.mxu0
    %v199 = vadd.f32 %v151, %v198
    %200 = vmatmul.f32.gmra.mxu0 %v173
    %v201 = vpop.f32.mrf.mxu0
    %v202 = vadd.f32 %v156, %v201
    %203 = vmatmul.f32.gmra.mxu0 %v176
    %v204 = vpop.f32.mrf.mxu0
    %v205 = vadd.f32 %v161, %v204
    %206 = vmatmul.f32.gmra.mxu0 %v179
    %v207 = vpop.f32.mrf.mxu0
    %v208 = vadd.f32 %v166, %v207
    %209 = vdwg.mxu0
    %s210 = scalar_lea.vmem %s0, 64
    %v211 = vld [vmem:[%s210] sm:$0xf]
    %v212 = vld [vmem:[%s210 + $0x4] sm:$0xf]
    %v213 = vld [vmem:[%s210 + $0x8] sm:$0xf]
    %v214 = vld [vmem:[%s210 + $0xc] sm:$0xf]
    %v215 = vld [vmem:[%s210 + $0x10] sm:$0xf]
    %v216 = vld [vmem:[%s210 + $0x14] sm:$0xf]
    %v217 = vld [vmem:[%s210 + $0x18] sm:$0xf]
    %v218 = vld [vmem:[%s210 + $0x1c] sm:$0xf]
    %v219 = vld [vmem:[%s210 + $0x20] sm:$0xf]
    %v220 = vld [vmem:[%s210 + $0x24] sm:$0xf]
    %v221 = vld [vmem:[%s210 + $0x28] sm:$0xf]
    %v222 = vld [vmem:[%s210 + $0x2c] sm:$0xf]
    %v223 = vld [vmem:[%s210 + $0x30] sm:$0xf]
    %v224 = vld [vmem:[%s210 + $0x34] sm:$0xf]
    %v225 = vld [vmem:[%s210 + $0x38] sm:$0xf]
    %v226 = vld [vmem:[%s210 + $0x3c] sm:$0xf]
    %v243 = vunpack.c.l.b16 %v211
    %v244 = vunpack.c.l.b16 %v212
    %v245 = vunpack.c.l.b16 %v213
    %v246 = vunpack.c.l.b16 %v214
    %v247 = vunpack.c.l.b16 %v215
    %v248 = vunpack.c.l.b16 %v216
    %v249 = vunpack.c.l.b16 %v217
    %v250 = vunpack.c.l.b16 %v218
    %v251 = vunpack.c.l.b16 %v219
    %v252 = vunpack.c.l.b16 %v220
    %v253 = vunpack.c.l.b16 %v221
    %v254 = vunpack.c.l.b16 %v222
    %v255 = vunpack.c.l.b16 %v223
    %v256 = vunpack.c.l.b16 %v224
    %v257 = vunpack.c.l.b16 %v225
    %v258 = vunpack.c.l.b16 %v226
    %v259 = vpack.c.b16 %v244, %v243
    %v260 = vpack.c.b16 %v246, %v245
    %v261 = vpack.c.b16 %v248, %v247
    %v262 = vpack.c.b16 %v250, %v249
    %v263 = vpack.c.b16 %v252, %v251
    %v264 = vpack.c.b16 %v254, %v253
    %v265 = vpack.c.b16 %v256, %v255
    %v266 = vpack.c.b16 %v258, %v257
    %275 = vmatpush.bf16.xpose.msra.mxu0 %v266
    %276 = vmatpush.bf16.xpose.msra.mxu0 %v265
    %277 = vmatpush.bf16.xpose.msra.mxu0 %v264
    %278 = vmatpush.bf16.xpose.msra.mxu0 %v263
    %279 = vmatpush.bf16.xpose.msra.mxu0 %v262
    %280 = vmatpush.bf16.xpose.msra.mxu0 %v261
    %281 = vmatpush.bf16.xpose.msra.mxu0 %v260
    %282 = vmatpush.bf16.xpose.msra.mxu0 %v259
    %283 = vmatmul.bf16.gmra.mxu0 1065369472
    %v284 = vpop.f32.mrf.mxu0
    %v285 = vadd.f32 0.0, %v284
    %v286 = vpop.f32.mrf.mxu0
    %287 = vdwg.mxu0
    %v288 = vmax.f32 %v285, 1.0
    %v289 = vrcp.pop %v288
    %v290 = vmul.f32 %v288, %v289
    %v291 = vsub.f32 1.0, %v290
    %v292 = vmul.f32 %v289, %v291
    %v293 = vadd.f32 %v289, %v292
    %vm294 = vweird.f32 %v288
    %vm295 = vweird.f32 %v289
    %vm296 = vmor %vm294, %vm295
    %v297 = vsel %vm296, %v289, %v293
    %v298 = vand.u32 2147483647, %v288
    %vm299 = vcmp.eq.f32.partialorder %v298, 8.507059e+37
    %v300 = vand.u32 %v288, 2147483648
    %v301 = vor.u32 1.1754944e-38, %v300
    %v302 = vsel %vm299, %v301, %v297
    %v303 = vmul.f32 1.0, %v302
    %304 = vmatpush.bf16.xpose.msra.mxu0 %v266
    %305 = vmatpush.bf16.xpose.msra.mxu0 %v265
    %306 = vmatpush.bf16.xpose.msra.mxu0 %v264
    %307 = vmatpush.bf16.xpose.msra.mxu0 %v263
    %308 = vmatpush.bf16.xpose.msra.mxu0 %v262
    %309 = vmatpush.bf16.xpose.msra.mxu0 %v261
    %310 = vmatpush.bf16.xpose.msra.mxu0 %v260
    %311 = vmatpush.bf16.xpose.msra.mxu0 %v259
    %312 = vmatmul.bf16.gmra.mxu0 %v121
    %v313 = vpop.f32.mrf.mxu0
    %v314 = vadd.f32 0.0, %v313
    %v315 = vpop.f32.mrf.mxu0
    %v316 = vadd.f32 0.0, %v315
    %317 = vdwg.mxu0
    %v318 = vperm.slane %v303, 0
    %v319 = vmul.f32 %v314, %v318
    %v320 = vmul.f32 %v316, %v318
    %s321 = scalar_lea.vmem %s2, 32
    %v322 = vld [vmem:[%s321] sm:$0xff]
    %v323 = vld [vmem:[%s321 + $0x8] sm:$0xff]
    %v324 = vld [vmem:[%s321 + $0x10] sm:$0xff]
    %v325 = vld [vmem:[%s321 + $0x18] sm:$0xff]
    %s326 = scalar_lea.vmem %s3, 32
    %v327 = vld [vmem:[%s326] sm:$0xff]
    %v328 = vld [vmem:[%s326 + $0x8] sm:$0xff]
    %v329 = vld [vmem:[%s326 + $0x10] sm:$0xff]
    %v330 = vld [vmem:[%s326 + $0x18] sm:$0xff]
    %332 = vset.pattern.permute.xlu0 0
    %333 = vperm.xlu0 %332, %v327
    %v334 = vpop.permute.xlu0 %333
    %337 = vset.pattern.permute.xlu0 0
    %338 = vperm.xlu0 %337, %v328
    %v339 = vpop.permute.xlu0 %338
    %342 = vset.pattern.permute.xlu0 0
    %343 = vperm.xlu0 %342, %v329
    %v344 = vpop.permute.xlu0 %343
    %347 = vset.pattern.permute.xlu0 0
    %348 = vperm.xlu0 %347, %v330
    %v349 = vpop.permute.xlu0 %348
    %v352 = vsel %vm168, %v322, 0
    %v355 = vsel %vm168, %v323, 0
    %v358 = vsel %vm168, %v324, 0
    %v361 = vsel %vm168, %v325, 0
    %363 = vmatpush.msra.mxu0 0.0
    %364 = vmatpush.msra.mxu0 0.0
    %365 = vmatpush.msra.mxu0 0.0
    %366 = vmatpush.msra.mxu0 0.0
    %367 = vmatpush.msra.mxu0 0.0
    %368 = vmatpush.msra.mxu0 0.0
    %369 = vmatpush.msra.mxu0 0.0
    %370 = vmatpush.msra.mxu0 0.0
    %371 = vmatpush.msra.mxu0 0.0
    %372 = vmatpush.msra.mxu0 0.0
    %373 = vmatpush.msra.mxu0 0.0
    %374 = vmatpush.msra.mxu0 0.0
    %375 = vmatpush.msra.mxu0 0.0
    %376 = vmatpush.msra.mxu0 0.0
    %377 = vmatpush.msra.mxu0 %v320
    %378 = vmatpush.msra.mxu0 %v319
    %379 = vmatmul.f32.gmra.mxu0 %v352
    %v380 = vpop.f32.mrf.mxu0
    %v381 = vadd.f32 %v334, %v380
    %382 = vmatmul.f32.gmra.mxu0 %v355
    %v383 = vpop.f32.mrf.mxu0
    %v384 = vadd.f32 %v339, %v383
    %385 = vmatmul.f32.gmra.mxu0 %v358
    %v386 = vpop.f32.mrf.mxu0
    %v387 = vadd.f32 %v344, %v386
    %388 = vmatmul.f32.gmra.mxu0 %v361
    %v389 = vpop.f32.mrf.mxu0
    %v390 = vadd.f32 %v349, %v389
    %391 = vdwg.mxu0
    %s392 = scalar_lea.vmem %s0, 128
    %v393 = vld [vmem:[%s392] sm:$0xf]
    %v394 = vld [vmem:[%s392 + $0x4] sm:$0xf]
    %v395 = vld [vmem:[%s392 + $0x8] sm:$0xf]
    %v396 = vld [vmem:[%s392 + $0xc] sm:$0xf]
    %v397 = vld [vmem:[%s392 + $0x10] sm:$0xf]
    %v398 = vld [vmem:[%s392 + $0x14] sm:$0xf]
    %v399 = vld [vmem:[%s392 + $0x18] sm:$0xf]
    %v400 = vld [vmem:[%s392 + $0x1c] sm:$0xf]
    %v401 = vld [vmem:[%s392 + $0x20] sm:$0xf]
    %v402 = vld [vmem:[%s392 + $0x24] sm:$0xf]
    %v403 = vld [vmem:[%s392 + $0x28] sm:$0xf]
    %v404 = vld [vmem:[%s392 + $0x2c] sm:$0xf]
    %v405 = vld [vmem:[%s392 + $0x30] sm:$0xf]
    %v406 = vld [vmem:[%s392 + $0x34] sm:$0xf]
    %v407 = vld [vmem:[%s392 + $0x38] sm:$0xf]
    %v408 = vld [vmem:[%s392 + $0x3c] sm:$0xf]
    %v425 = vunpack.c.l.b16 %v393
    %v426 = vunpack.c.l.b16 %v394
    %v427 = vunpack.c.l.b16 %v395
    %v428 = vunpack.c.l.b16 %v396
    %v429 = vunpack.c.l.b16 %v397
    %v430 = vunpack.c.l.b16 %v398
    %v431 = vunpack.c.l.b16 %v399
    %v432 = vunpack.c.l.b16 %v400
    %v433 = vunpack.c.l.b16 %v401
    %v434 = vunpack.c.l.b16 %v402
    %v435 = vunpack.c.l.b16 %v403
    %v436 = vunpack.c.l.b16 %v404
    %v437 = vunpack.c.l.b16 %v405
    %v438 = vunpack.c.l.b16 %v406
    %v439 = vunpack.c.l.b16 %v407
    %v440 = vunpack.c.l.b16 %v408
    %v441 = vpack.c.b16 %v426, %v425
    %v442 = vpack.c.b16 %v428, %v427
    %v443 = vpack.c.b16 %v430, %v429
    %v444 = vpack.c.b16 %v432, %v431
    %v445 = vpack.c.b16 %v434, %v433
    %v446 = vpack.c.b16 %v436, %v435
    %v447 = vpack.c.b16 %v438, %v437
    %v448 = vpack.c.b16 %v440, %v439
    %457 = vmatpush.bf16.xpose.msra.mxu0 %v448
    %458 = vmatpush.bf16.xpose.msra.mxu0 %v447
    %459 = vmatpush.bf16.xpose.msra.mxu0 %v446
    %460 = vmatpush.bf16.xpose.msra.mxu0 %v445
    %461 = vmatpush.bf16.xpose.msra.mxu0 %v444
    %462 = vmatpush.bf16.xpose.msra.mxu0 %v443
    %463 = vmatpush.bf16.xpose.msra.mxu0 %v442
    %464 = vmatpush.bf16.xpose.msra.mxu0 %v441
    %465 = vmatmul.bf16.gmra.mxu0 1065369472
    %v466 = vpop.f32.mrf.mxu0
    %v467 = vadd.f32 0.0, %v466
    %v468 = vpop.f32.mrf.mxu0
    %469 = vdwg.mxu0
    %v470 = vmax.f32 %v467, 1.0
    %v471 = vrcp.pop %v470
    %v472 = vmul.f32 %v470, %v471
    %v473 = vsub.f32 1.0, %v472
    %v474 = vmul.f32 %v471, %v473
    %v475 = vadd.f32 %v471, %v474
    %vm476 = vweird.f32 %v470
    %vm477 = vweird.f32 %v471
    %vm478 = vmor %vm476, %vm477
    %v479 = vsel %vm478, %v471, %v475
    %v480 = vand.u32 2147483647, %v470
    %vm481 = vcmp.eq.f32.partialorder %v480, 8.507059e+37
    %v482 = vand.u32 %v470, 2147483648
    %v483 = vor.u32 1.1754944e-38, %v482
    %v484 = vsel %vm481, %v483, %v479
    %v485 = vmul.f32 1.0, %v484
    %s486 = scalar_lea.vmem %s1, 8
    %v487 = vld [vmem:[%s486] sm:$0xf]
    %v488 = vld [vmem:[%s486 + $0x4] sm:$0xf]
    %v491 = vunpack.c.l.b16 %v487
    %v492 = vunpack.c.l.b16 %v488
    %v493 = vpack.c.b16 %v492, %v491
    %495 = vmatpush.bf16.xpose.msra.mxu0 %v448
    %496 = vmatpush.bf16.xpose.msra.mxu0 %v447
    %497 = vmatpush.bf16.xpose.msra.mxu0 %v446
    %498 = vmatpush.bf16.xpose.msra.mxu0 %v445
    %499 = vmatpush.bf16.xpose.msra.mxu0 %v444
    %500 = vmatpush.bf16.xpose.msra.mxu0 %v443
    %501 = vmatpush.bf16.xpose.msra.mxu0 %v442
    %502 = vmatpush.bf16.xpose.msra.mxu0 %v441
    %503 = vmatmul.bf16.gmra.mxu0 %v493
    %v504 = vpop.f32.mrf.mxu0
    %v505 = vadd.f32 0.0, %v504
    %v506 = vpop.f32.mrf.mxu0
    %v507 = vadd.f32 0.0, %v506
    %508 = vdwg.mxu0
    %v509 = vperm.slane %v485, 0
    %v510 = vmul.f32 %v505, %v509
    %v511 = vmul.f32 %v507, %v509
    %s512 = scalar_lea.vmem %s2, 64
    %v513 = vld [vmem:[%s512] sm:$0xff]
    %v514 = vld [vmem:[%s512 + $0x8] sm:$0xff]
    %v515 = vld [vmem:[%s512 + $0x10] sm:$0xff]
    %v516 = vld [vmem:[%s512 + $0x18] sm:$0xff]
    %s517 = scalar_lea.vmem %s3, 64
    %v518 = vld [vmem:[%s517] sm:$0xff]
    %v519 = vld [vmem:[%s517 + $0x8] sm:$0xff]
    %v520 = vld [vmem:[%s517 + $0x10] sm:$0xff]
    %v521 = vld [vmem:[%s517 + $0x18] sm:$0xff]
    %523 = vset.pattern.permute.xlu0 0
    %524 = vperm.xlu0 %523, %v518
    %v525 = vpop.permute.xlu0 %524
    %528 = vset.pattern.permute.xlu0 0
    %529 = vperm.xlu0 %528, %v519
    %v530 = vpop.permute.xlu0 %529
    %533 = vset.pattern.permute.xlu0 0
    %534 = vperm.xlu0 %533, %v520
    %v535 = vpop.permute.xlu0 %534
    %538 = vset.pattern.permute.xlu0 0
    %539 = vperm.xlu0 %538, %v521
    %v540 = vpop.permute.xlu0 %539
    %v543 = vsel %vm168, %v513, 0
    %v546 = vsel %vm168, %v514, 0
    %v549 = vsel %vm168, %v515, 0
    %v552 = vsel %vm168, %v516, 0
    %554 = vmatpush.msra.mxu0 0.0
    %555 = vmatpush.msra.mxu0 0.0
    %556 = vmatpush.msra.mxu0 0.0
    %557 = vmatpush.msra.mxu0 0.0
    %558 = vmatpush.msra.mxu0 0.0
    %559 = vmatpush.msra.mxu0 0.0
    %560 = vmatpush.msra.mxu0 0.0
    %561 = vmatpush.msra.mxu0 0.0
    %562 = vmatpush.msra.mxu0 0.0
    %563 = vmatpush.msra.mxu0 0.0
    %564 = vmatpush.msra.mxu0 0.0
    %565 = vmatpush.msra.mxu0 0.0
    %566 = vmatpush.msra.mxu0 0.0
    %567 = vmatpush.msra.mxu0 0.0
    %568 = vmatpush.msra.mxu0 %v511
    %569 = vmatpush.msra.mxu0 %v510
    %570 = vmatmul.f32.gmra.mxu0 %v543
    %v571 = vpop.f32.mrf.mxu0
    %v572 = vadd.f32 %v525, %v571
    %573 = vmatmul.f32.gmra.mxu0 %v546
    %v574 = vpop.f32.mrf.mxu0
    %v575 = vadd.f32 %v530, %v574
    %576 = vmatmul.f32.gmra.mxu0 %v549
    %v577 = vpop.f32.mrf.mxu0
    %v578 = vadd.f32 %v535, %v577
    %579 = vmatmul.f32.gmra.mxu0 %v552
    %v580 = vpop.f32.mrf.mxu0
    %v581 = vadd.f32 %v540, %v580
    %582 = vdwg.mxu0
    %v583 = vadd.f32 %v381, %v572
    %v584 = vadd.f32 %v384, %v575
    %v585 = vadd.f32 %v387, %v578
    %v586 = vadd.f32 %v390, %v581
    %v587 = vlaneseq
    %v588 = vshrl.u32 %v587, 7
    %v589 = vadd.s32 %v588, 8
    %v590 = vadd.s32 %v588, 16
    %v591 = vadd.s32 %v588, 24
    %v592 = vadd.s32 %v588, 32
    %v593 = vadd.s32 %v588, 40
    %v594 = vadd.s32 %v588, 48
    %v595 = vadd.s32 %v588, 56
    %v596 = vadd.s32 %v588, 64
    %v597 = vadd.s32 %v588, 72
    %v598 = vadd.s32 %v588, 80
    %v599 = vadd.s32 %v588, 88
    %v600 = vadd.s32 %v588, 96
    %v601 = vadd.s32 %v588, 104
    %v602 = vadd.s32 %v588, 112
    %v603 = vadd.s32 %v588, 120
    %v604 = vld [vmem:[%s4] ss:$2 sm:$0x3f]
    %v605 = vperm.slane %v604, 0
    %v606 = vperm.slane %v604, 1
    %v607 = vperm.slane %v604, 2
    %v608 = vperm.slane %v604, 3
    %v609 = vperm.slane %v604, 4
    %v610 = vperm.slane %v604, 5
    %vm611 = vcmp.eq.s32.totalorder %v588, %v605
    %vm612 = vcmp.eq.s32.totalorder %v588, %v606
    %vm613 = vcmp.eq.s32.totalorder %v588, %v607
    %vm614 = vcmp.eq.s32.totalorder %v588, %v608
    %vm615 = vcmp.eq.s32.totalorder %v588, %v609
    %vm616 = vcmp.eq.s32.totalorder %v588, %v610
    %vm617 = vcmp.eq.s32.totalorder %v589, %v605
    %vm618 = vcmp.eq.s32.totalorder %v589, %v606
    %vm619 = vcmp.eq.s32.totalorder %v589, %v607
    %vm620 = vcmp.eq.s32.totalorder %v589, %v608
    %vm621 = vcmp.eq.s32.totalorder %v589, %v609
    %vm622 = vcmp.eq.s32.totalorder %v589, %v610
    %vm623 = vcmp.eq.s32.totalorder %v590, %v605
    %vm624 = vcmp.eq.s32.totalorder %v590, %v606
    %vm625 = vcmp.eq.s32.totalorder %v590, %v607
    %vm626 = vcmp.eq.s32.totalorder %v590, %v608
    %vm627 = vcmp.eq.s32.totalorder %v590, %v609
    %vm628 = vcmp.eq.s32.totalorder %v590, %v610
    %vm629 = vcmp.eq.s32.totalorder %v591, %v605
    %vm630 = vcmp.eq.s32.totalorder %v591, %v606
    %vm631 = vcmp.eq.s32.totalorder %v591, %v607
    %vm632 = vcmp.eq.s32.totalorder %v591, %v608
    %vm633 = vcmp.eq.s32.totalorder %v591, %v609
    %vm634 = vcmp.eq.s32.totalorder %v591, %v610
    %vm635 = vcmp.eq.s32.totalorder %v592, %v605
    %vm636 = vcmp.eq.s32.totalorder %v592, %v606
    %vm637 = vcmp.eq.s32.totalorder %v592, %v607
    %vm638 = vcmp.eq.s32.totalorder %v592, %v608
    %vm639 = vcmp.eq.s32.totalorder %v592, %v609
    %vm640 = vcmp.eq.s32.totalorder %v592, %v610
    %vm641 = vcmp.eq.s32.totalorder %v593, %v605
    %vm642 = vcmp.eq.s32.totalorder %v593, %v606
    %vm643 = vcmp.eq.s32.totalorder %v593, %v607
    %vm644 = vcmp.eq.s32.totalorder %v593, %v608
    %vm645 = vcmp.eq.s32.totalorder %v593, %v609
    %vm646 = vcmp.eq.s32.totalorder %v593, %v610
    %vm647 = vcmp.eq.s32.totalorder %v594, %v605
    %vm648 = vcmp.eq.s32.totalorder %v594, %v606
    %vm649 = vcmp.eq.s32.totalorder %v594, %v607
    %vm650 = vcmp.eq.s32.totalorder %v594, %v608
    %vm651 = vcmp.eq.s32.totalorder %v594, %v609
    %vm652 = vcmp.eq.s32.totalorder %v594, %v610
    %vm653 = vcmp.eq.s32.totalorder %v595, %v605
    %vm654 = vcmp.eq.s32.totalorder %v595, %v606
    %vm655 = vcmp.eq.s32.totalorder %v595, %v607
    %vm656 = vcmp.eq.s32.totalorder %v595, %v608
    %vm657 = vcmp.eq.s32.totalorder %v595, %v609
    %vm658 = vcmp.eq.s32.totalorder %v595, %v610
    %vm659 = vcmp.eq.s32.totalorder %v596, %v605
    %vm660 = vcmp.eq.s32.totalorder %v596, %v606
    %vm661 = vcmp.eq.s32.totalorder %v596, %v607
    %vm662 = vcmp.eq.s32.totalorder %v596, %v608
    %vm663 = vcmp.eq.s32.totalorder %v596, %v609
    %vm664 = vcmp.eq.s32.totalorder %v596, %v610
    %vm665 = vcmp.eq.s32.totalorder %v597, %v605
    %vm666 = vcmp.eq.s32.totalorder %v597, %v606
    %vm667 = vcmp.eq.s32.totalorder %v597, %v607
    %vm668 = vcmp.eq.s32.totalorder %v597, %v608
    %vm669 = vcmp.eq.s32.totalorder %v597, %v609
    %vm670 = vcmp.eq.s32.totalorder %v597, %v610
    %vm671 = vcmp.eq.s32.totalorder %v598, %v605
    %vm672 = vcmp.eq.s32.totalorder %v598, %v606
    %vm673 = vcmp.eq.s32.totalorder %v598, %v607
    %vm674 = vcmp.eq.s32.totalorder %v598, %v608
    %vm675 = vcmp.eq.s32.totalorder %v598, %v609
    %vm676 = vcmp.eq.s32.totalorder %v598, %v610
    %vm677 = vcmp.eq.s32.totalorder %v599, %v605
    %vm678 = vcmp.eq.s32.totalorder %v599, %v606
    %vm679 = vcmp.eq.s32.totalorder %v599, %v607
    %vm680 = vcmp.eq.s32.totalorder %v599, %v608
    %vm681 = vcmp.eq.s32.totalorder %v599, %v609
    %vm682 = vcmp.eq.s32.totalorder %v599, %v610
    %vm683 = vcmp.eq.s32.totalorder %v600, %v605
    %vm684 = vcmp.eq.s32.totalorder %v600, %v606
    %vm685 = vcmp.eq.s32.totalorder %v600, %v607
    %vm686 = vcmp.eq.s32.totalorder %v600, %v608
    %vm687 = vcmp.eq.s32.totalorder %v600, %v609
    %vm688 = vcmp.eq.s32.totalorder %v600, %v610
    %vm689 = vcmp.eq.s32.totalorder %v601, %v605
    %vm690 = vcmp.eq.s32.totalorder %v601, %v606
    %vm691 = vcmp.eq.s32.totalorder %v601, %v607
    %vm692 = vcmp.eq.s32.totalorder %v601, %v608
    %vm693 = vcmp.eq.s32.totalorder %v601, %v609
    %vm694 = vcmp.eq.s32.totalorder %v601, %v610
    %vm695 = vcmp.eq.s32.totalorder %v602, %v605
    %vm696 = vcmp.eq.s32.totalorder %v602, %v606
    %vm697 = vcmp.eq.s32.totalorder %v602, %v607
    %vm698 = vcmp.eq.s32.totalorder %v602, %v608
    %vm699 = vcmp.eq.s32.totalorder %v602, %v609
    %vm700 = vcmp.eq.s32.totalorder %v602, %v610
    %vm701 = vcmp.eq.s32.totalorder %v603, %v605
    %vm702 = vcmp.eq.s32.totalorder %v603, %v606
    %vm703 = vcmp.eq.s32.totalorder %v603, %v607
    %vm704 = vcmp.eq.s32.totalorder %v603, %v608
    %vm705 = vcmp.eq.s32.totalorder %v603, %v609
    %vm706 = vcmp.eq.s32.totalorder %v603, %v610
    %v707 = vsel %vm611, 1, 0
    %v708 = vsel %vm612, 1, 0
    %v709 = vsel %vm613, 1, 0
    %v710 = vsel %vm614, 1, 0
    %v711 = vsel %vm615, 1, 0
    %v712 = vsel %vm616, 1, 0
    %v713 = vsel %vm617, 1, 0
    %v714 = vsel %vm618, 1, 0
    %v715 = vsel %vm619, 1, 0
    %v716 = vsel %vm620, 1, 0
    %v717 = vsel %vm621, 1, 0
    %v718 = vsel %vm622, 1, 0
    %v719 = vsel %vm623, 1, 0
    %v720 = vsel %vm624, 1, 0
    %v721 = vsel %vm625, 1, 0
    %v722 = vsel %vm626, 1, 0
    %v723 = vsel %vm627, 1, 0
    %v724 = vsel %vm628, 1, 0
    %v725 = vsel %vm629, 1, 0
    %v726 = vsel %vm630, 1, 0
    %v727 = vsel %vm631, 1, 0
    %v728 = vsel %vm632, 1, 0
    %v729 = vsel %vm633, 1, 0
    %v730 = vsel %vm634, 1, 0
    %v731 = vsel %vm635, 1, 0
    %v732 = vsel %vm636, 1, 0
    %v733 = vsel %vm637, 1, 0
    %v734 = vsel %vm638, 1, 0
    %v735 = vsel %vm639, 1, 0
    %v736 = vsel %vm640, 1, 0
    %v737 = vsel %vm641, 1, 0
    %v738 = vsel %vm642, 1, 0
    %v739 = vsel %vm643, 1, 0
    %v740 = vsel %vm644, 1, 0
    %v741 = vsel %vm645, 1, 0
    %v742 = vsel %vm646, 1, 0
    %v743 = vsel %vm647, 1, 0
    %v744 = vsel %vm648, 1, 0
    %v745 = vsel %vm649, 1, 0
    %v746 = vsel %vm650, 1, 0
    %v747 = vsel %vm651, 1, 0
    %v748 = vsel %vm652, 1, 0
    %v749 = vsel %vm653, 1, 0
    %v750 = vsel %vm654, 1, 0
    %v751 = vsel %vm655, 1, 0
    %v752 = vsel %vm656, 1, 0
    %v753 = vsel %vm657, 1, 0
    %v754 = vsel %vm658, 1, 0
    %v755 = vsel %vm659, 1, 0
    %v756 = vsel %vm660, 1, 0
    %v757 = vsel %vm661, 1, 0
    %v758 = vsel %vm662, 1, 0
    %v759 = vsel %vm663, 1, 0
    %v760 = vsel %vm664, 1, 0
    %v761 = vsel %vm665, 1, 0
    %v762 = vsel %vm666, 1, 0
    %v763 = vsel %vm667, 1, 0
    %v764 = vsel %vm668, 1, 0
    %v765 = vsel %vm669, 1, 0
    %v766 = vsel %vm670, 1, 0
    %v767 = vsel %vm671, 1, 0
    %v768 = vsel %vm672, 1, 0
    %v769 = vsel %vm673, 1, 0
    %v770 = vsel %vm674, 1, 0
    %v771 = vsel %vm675, 1, 0
    %v772 = vsel %vm676, 1, 0
    %v773 = vsel %vm677, 1, 0
    %v774 = vsel %vm678, 1, 0
    %v775 = vsel %vm679, 1, 0
    %v776 = vsel %vm680, 1, 0
    %v777 = vsel %vm681, 1, 0
    %v778 = vsel %vm682, 1, 0
    %v779 = vsel %vm683, 1, 0
    %v780 = vsel %vm684, 1, 0
    %v781 = vsel %vm685, 1, 0
    %v782 = vsel %vm686, 1, 0
    %v783 = vsel %vm687, 1, 0
    %v784 = vsel %vm688, 1, 0
    %v785 = vsel %vm689, 1, 0
    %v786 = vsel %vm690, 1, 0
    %v787 = vsel %vm691, 1, 0
    %v788 = vsel %vm692, 1, 0
    %v789 = vsel %vm693, 1, 0
    %v790 = vsel %vm694, 1, 0
    %v791 = vsel %vm695, 1, 0
    %v792 = vsel %vm696, 1, 0
    %v793 = vsel %vm697, 1, 0
    %v794 = vsel %vm698, 1, 0
    %v795 = vsel %vm699, 1, 0
    %v796 = vsel %vm700, 1, 0
    %v797 = vsel %vm701, 1, 0
    %v798 = vsel %vm702, 1, 0
    %v799 = vsel %vm703, 1, 0
    %v800 = vsel %vm704, 1, 0
    %v801 = vsel %vm705, 1, 0
    %v802 = vsel %vm706, 1, 0
    %v803 = vcvt.s32.f32 %v707
    %v804 = vcvt.s32.f32 %v708
    %v805 = vcvt.s32.f32 %v709
    %v806 = vcvt.s32.f32 %v710
    %v807 = vcvt.s32.f32 %v711
    %v808 = vcvt.s32.f32 %v712
    %v809 = vcvt.s32.f32 %v713
    %v810 = vcvt.s32.f32 %v714
    %v811 = vcvt.s32.f32 %v715
    %v812 = vcvt.s32.f32 %v716
    %v813 = vcvt.s32.f32 %v717
    %v814 = vcvt.s32.f32 %v718
    %v815 = vcvt.s32.f32 %v719
    %v816 = vcvt.s32.f32 %v720
    %v817 = vcvt.s32.f32 %v721
    %v818 = vcvt.s32.f32 %v722
    %v819 = vcvt.s32.f32 %v723
    %v820 = vcvt.s32.f32 %v724
    %v821 = vcvt.s32.f32 %v725
    %v822 = vcvt.s32.f32 %v726
    %v823 = vcvt.s32.f32 %v727
    %v824 = vcvt.s32.f32 %v728
    %v825 = vcvt.s32.f32 %v729
    %v826 = vcvt.s32.f32 %v730
    %v827 = vcvt.s32.f32 %v731
    %v828 = vcvt.s32.f32 %v732
    %v829 = vcvt.s32.f32 %v733
    %v830 = vcvt.s32.f32 %v734
    %v831 = vcvt.s32.f32 %v735
    %v832 = vcvt.s32.f32 %v736
    %v833 = vcvt.s32.f32 %v737
    %v834 = vcvt.s32.f32 %v738
    %v835 = vcvt.s32.f32 %v739
    %v836 = vcvt.s32.f32 %v740
    %v837 = vcvt.s32.f32 %v741
    %v838 = vcvt.s32.f32 %v742
    %v839 = vcvt.s32.f32 %v743
    %v840 = vcvt.s32.f32 %v744
    %v841 = vcvt.s32.f32 %v745
    %v842 = vcvt.s32.f32 %v746
    %v843 = vcvt.s32.f32 %v747
    %v844 = vcvt.s32.f32 %v748
    %v845 = vcvt.s32.f32 %v749
    %v846 = vcvt.s32.f32 %v750
    %v847 = vcvt.s32.f32 %v751
    %v848 = vcvt.s32.f32 %v752
    %v849 = vcvt.s32.f32 %v753
    %v850 = vcvt.s32.f32 %v754
    %v851 = vcvt.s32.f32 %v755
    %v852 = vcvt.s32.f32 %v756
    %v853 = vcvt.s32.f32 %v757
    %v854 = vcvt.s32.f32 %v758
    %v855 = vcvt.s32.f32 %v759
    %v856 = vcvt.s32.f32 %v760
    %v857 = vcvt.s32.f32 %v761
    %v858 = vcvt.s32.f32 %v762
    %v859 = vcvt.s32.f32 %v763
    %v860 = vcvt.s32.f32 %v764
    %v861 = vcvt.s32.f32 %v765
    %v862 = vcvt.s32.f32 %v766
    %v863 = vcvt.s32.f32 %v767
    %v864 = vcvt.s32.f32 %v768
    %v865 = vcvt.s32.f32 %v769
    %v866 = vcvt.s32.f32 %v770
    %v867 = vcvt.s32.f32 %v771
    %v868 = vcvt.s32.f32 %v772
    %v869 = vcvt.s32.f32 %v773
    %v870 = vcvt.s32.f32 %v774
    %v871 = vcvt.s32.f32 %v775
    %v872 = vcvt.s32.f32 %v776
    %v873 = vcvt.s32.f32 %v777
    %v874 = vcvt.s32.f32 %v778
    %v875 = vcvt.s32.f32 %v779
    %v876 = vcvt.s32.f32 %v780
    %v877 = vcvt.s32.f32 %v781
    %v878 = vcvt.s32.f32 %v782
    %v879 = vcvt.s32.f32 %v783
    %v880 = vcvt.s32.f32 %v784
    %v881 = vcvt.s32.f32 %v785
    %v882 = vcvt.s32.f32 %v786
    %v883 = vcvt.s32.f32 %v787
    %v884 = vcvt.s32.f32 %v788
    %v885 = vcvt.s32.f32 %v789
    %v886 = vcvt.s32.f32 %v790
    %v887 = vcvt.s32.f32 %v791
    %v888 = vcvt.s32.f32 %v792
    %v889 = vcvt.s32.f32 %v793
    %v890 = vcvt.s32.f32 %v794
    %v891 = vcvt.s32.f32 %v795
    %v892 = vcvt.s32.f32 %v796
    %v893 = vcvt.s32.f32 %v797
    %v894 = vcvt.s32.f32 %v798
    %v895 = vcvt.s32.f32 %v799
    %v896 = vcvt.s32.f32 %v800
    %v897 = vcvt.s32.f32 %v801
    %v898 = vcvt.s32.f32 %v802
    %v899 = vpack.c.bf16 %v809, %v803
    %v900 = vpack.c.bf16 %v810, %v804
    %v901 = vpack.c.bf16 %v811, %v805
    %v902 = vpack.c.bf16 %v812, %v806
    %v903 = vpack.c.bf16 %v813, %v807
    %v904 = vpack.c.bf16 %v814, %v808
    %v905 = vpack.c.bf16 %v821, %v815
    %v906 = vpack.c.bf16 %v822, %v816
    %v907 = vpack.c.bf16 %v823, %v817
    %v908 = vpack.c.bf16 %v824, %v818
    %v909 = vpack.c.bf16 %v825, %v819
    %v910 = vpack.c.bf16 %v826, %v820
    %v911 = vpack.c.bf16 %v833, %v827
    %v912 = vpack.c.bf16 %v834, %v828
    %v913 = vpack.c.bf16 %v835, %v829
    %v914 = vpack.c.bf16 %v836, %v830
    %v915 = vpack.c.bf16 %v837, %v831
    %v916 = vpack.c.bf16 %v838, %v832
    %v917 = vpack.c.bf16 %v845, %v839
    %v918 = vpack.c.bf16 %v846, %v840
    %v919 = vpack.c.bf16 %v847, %v841
    %v920 = vpack.c.bf16 %v848, %v842
    %v921 = vpack.c.bf16 %v849, %v843
    %v922 = vpack.c.bf16 %v850, %v844
    %v923 = vpack.c.bf16 %v857, %v851
    %v924 = vpack.c.bf16 %v858, %v852
    %v925 = vpack.c.bf16 %v859, %v853
    %v926 = vpack.c.bf16 %v860, %v854
    %v927 = vpack.c.bf16 %v861, %v855
    %v928 = vpack.c.bf16 %v862, %v856
    %v929 = vpack.c.bf16 %v869, %v863
    %v930 = vpack.c.bf16 %v870, %v864
    %v931 = vpack.c.bf16 %v871, %v865
    %v932 = vpack.c.bf16 %v872, %v866
    %v933 = vpack.c.bf16 %v873, %v867
    %v934 = vpack.c.bf16 %v874, %v868
    %v935 = vpack.c.bf16 %v881, %v875
    %v936 = vpack.c.bf16 %v882, %v876
    %v937 = vpack.c.bf16 %v883, %v877
    %v938 = vpack.c.bf16 %v884, %v878
    %v939 = vpack.c.bf16 %v885, %v879
    %v940 = vpack.c.bf16 %v886, %v880
    %v941 = vpack.c.bf16 %v893, %v887
    %v942 = vpack.c.bf16 %v894, %v888
    %v943 = vpack.c.bf16 %v895, %v889
    %v944 = vpack.c.bf16 %v896, %v890
    %v945 = vpack.c.bf16 %v897, %v891
    %v946 = vpack.c.bf16 %v898, %v892
    %v947 = vpack.c.bf16 %v202, %v199
    %v948 = vpack.c.bf16 %v208, %v205
    %949 = vmatpush.bf16.msra.mxu0 %v941
    %950 = vmatpush.bf16.msra.mxu0 %v935
    %951 = vmatpush.bf16.msra.mxu0 %v929
    %952 = vmatpush.bf16.msra.mxu0 %v923
    %953 = vmatpush.bf16.msra.mxu0 %v917
    %954 = vmatpush.bf16.msra.mxu0 %v911
    %955 = vmatpush.bf16.msra.mxu0 %v905
    %956 = vmatpush.bf16.msra.mxu0 %v899
    %957 = vmatmul.bf16.gmra.mxu0 %v947
    %v958 = vpop.f32.mrf.mxu0
    %v959 = vadd.f32 0.0, %v958
    %v960 = vpop.f32.mrf.mxu0
    %v961 = vadd.f32 0.0, %v960
    %962 = vmatmul.bf16.gmra.mxu0 %v948
    %v963 = vpop.f32.mrf.mxu0
    %v964 = vadd.f32 0.0, %v963
    %v965 = vpop.f32.mrf.mxu0
    %v966 = vadd.f32 0.0, %v965
    %967 = vdwg.mxu0
    %968 = vmatpush.bf16.msra.mxu0 %v942
    %969 = vmatpush.bf16.msra.mxu0 %v936
    %970 = vmatpush.bf16.msra.mxu0 %v930
    %971 = vmatpush.bf16.msra.mxu0 %v924
    %972 = vmatpush.bf16.msra.mxu0 %v918
    %973 = vmatpush.bf16.msra.mxu0 %v912
    %974 = vmatpush.bf16.msra.mxu0 %v906
    %975 = vmatpush.bf16.msra.mxu0 %v900
    %976 = vmatmul.bf16.gmra.mxu0 %v947
    %v977 = vpop.f32.mrf.mxu0
    %v978 = vadd.f32 0.0, %v977
    %v979 = vpop.f32.mrf.mxu0
    %v980 = vadd.f32 0.0, %v979
    %981 = vmatmul.bf16.gmra.mxu0 %v948
    %v982 = vpop.f32.mrf.mxu0
    %v983 = vadd.f32 0.0, %v982
    %v984 = vpop.f32.mrf.mxu0
    %v985 = vadd.f32 0.0, %v984
    %986 = vdwg.mxu0
    %987 = vmatpush.bf16.msra.mxu0 %v943
    %988 = vmatpush.bf16.msra.mxu0 %v937
    %989 = vmatpush.bf16.msra.mxu0 %v931
    %990 = vmatpush.bf16.msra.mxu0 %v925
    %991 = vmatpush.bf16.msra.mxu0 %v919
    %992 = vmatpush.bf16.msra.mxu0 %v913
    %993 = vmatpush.bf16.msra.mxu0 %v907
    %994 = vmatpush.bf16.msra.mxu0 %v901
    %995 = vmatmul.bf16.gmra.mxu0 %v947
    %v996 = vpop.f32.mrf.mxu0
    %v997 = vadd.f32 0.0, %v996
    %v998 = vpop.f32.mrf.mxu0
    %v999 = vadd.f32 0.0, %v998
    %1000 = vmatmul.bf16.gmra.mxu0 %v948
    %v1001 = vpop.f32.mrf.mxu0
    %v1002 = vadd.f32 0.0, %v1001
    %v1003 = vpop.f32.mrf.mxu0
    %v1004 = vadd.f32 0.0, %v1003
    %1005 = vdwg.mxu0
    %1006 = vmatpush.bf16.msra.mxu0 %v944
    %1007 = vmatpush.bf16.msra.mxu0 %v938
    %1008 = vmatpush.bf16.msra.mxu0 %v932
    %1009 = vmatpush.bf16.msra.mxu0 %v926
    %1010 = vmatpush.bf16.msra.mxu0 %v920
    %1011 = vmatpush.bf16.msra.mxu0 %v914
    %1012 = vmatpush.bf16.msra.mxu0 %v908
    %1013 = vmatpush.bf16.msra.mxu0 %v902
    %1014 = vmatmul.bf16.gmra.mxu0 %v947
    %v1015 = vpop.f32.mrf.mxu0
    %v1016 = vadd.f32 0.0, %v1015
    %v1017 = vpop.f32.mrf.mxu0
    %v1018 = vadd.f32 0.0, %v1017
    %1019 = vmatmul.bf16.gmra.mxu0 %v948
    %v1020 = vpop.f32.mrf.mxu0
    %v1021 = vadd.f32 0.0, %v1020
    %v1022 = vpop.f32.mrf.mxu0
    %v1023 = vadd.f32 0.0, %v1022
    %1024 = vdwg.mxu0
    %1025 = vmatpush.bf16.msra.mxu0 %v945
    %1026 = vmatpush.bf16.msra.mxu0 %v939
    %1027 = vmatpush.bf16.msra.mxu0 %v933
    %1028 = vmatpush.bf16.msra.mxu0 %v927
    %1029 = vmatpush.bf16.msra.mxu0 %v921
    %1030 = vmatpush.bf16.msra.mxu0 %v915
    %1031 = vmatpush.bf16.msra.mxu0 %v909
    %1032 = vmatpush.bf16.msra.mxu0 %v903
    %1033 = vmatmul.bf16.gmra.mxu0 %v947
    %v1034 = vpop.f32.mrf.mxu0
    %v1035 = vadd.f32 0.0, %v1034
    %v1036 = vpop.f32.mrf.mxu0
    %v1037 = vadd.f32 0.0, %v1036
    %1038 = vmatmul.bf16.gmra.mxu0 %v948
    %v1039 = vpop.f32.mrf.mxu0
    %v1040 = vadd.f32 0.0, %v1039
    %v1041 = vpop.f32.mrf.mxu0
    %v1042 = vadd.f32 0.0, %v1041
    %1043 = vdwg.mxu0
    %1044 = vmatpush.bf16.msra.mxu0 %v946
    %1045 = vmatpush.bf16.msra.mxu0 %v940
    %1046 = vmatpush.bf16.msra.mxu0 %v934
    %1047 = vmatpush.bf16.msra.mxu0 %v928
    %1048 = vmatpush.bf16.msra.mxu0 %v922
    %1049 = vmatpush.bf16.msra.mxu0 %v916
    %1050 = vmatpush.bf16.msra.mxu0 %v910
    %1051 = vmatpush.bf16.msra.mxu0 %v904
    %1052 = vmatmul.bf16.gmra.mxu0 %v947
    %v1053 = vpop.f32.mrf.mxu0
    %v1054 = vadd.f32 0.0, %v1053
    %v1055 = vpop.f32.mrf.mxu0
    %v1056 = vadd.f32 0.0, %v1055
    %1057 = vmatmul.bf16.gmra.mxu0 %v948
    %v1058 = vpop.f32.mrf.mxu0
    %v1059 = vadd.f32 0.0, %v1058
    %v1060 = vpop.f32.mrf.mxu0
    %v1061 = vadd.f32 0.0, %v1060
    %1062 = vdwg.mxu0
    %s1063 = scalar_lea.vmem %s4, 1
    %v1064 = vld [vmem:[%s1063] ss:$2 sm:$0x3f]
    %v1065 = vperm.slane %v1064, 0
    %v1066 = vperm.slane %v1064, 1
    %v1067 = vperm.slane %v1064, 2
    %v1068 = vperm.slane %v1064, 3
    %v1069 = vperm.slane %v1064, 4
    %v1070 = vperm.slane %v1064, 5
    %vm1071 = vcmp.eq.s32.totalorder %v588, %v1065
    %vm1072 = vcmp.eq.s32.totalorder %v588, %v1066
    %vm1073 = vcmp.eq.s32.totalorder %v588, %v1067
    %vm1074 = vcmp.eq.s32.totalorder %v588, %v1068
    %vm1075 = vcmp.eq.s32.totalorder %v588, %v1069
    %vm1076 = vcmp.eq.s32.totalorder %v588, %v1070
    %vm1077 = vcmp.eq.s32.totalorder %v589, %v1065
    %vm1078 = vcmp.eq.s32.totalorder %v589, %v1066
    %vm1079 = vcmp.eq.s32.totalorder %v589, %v1067
    %vm1080 = vcmp.eq.s32.totalorder %v589, %v1068
    %vm1081 = vcmp.eq.s32.totalorder %v589, %v1069
    %vm1082 = vcmp.eq.s32.totalorder %v589, %v1070
    %vm1083 = vcmp.eq.s32.totalorder %v590, %v1065
    %vm1084 = vcmp.eq.s32.totalorder %v590, %v1066
    %vm1085 = vcmp.eq.s32.totalorder %v590, %v1067
    %vm1086 = vcmp.eq.s32.totalorder %v590, %v1068
    %vm1087 = vcmp.eq.s32.totalorder %v590, %v1069
    %vm1088 = vcmp.eq.s32.totalorder %v590, %v1070
    %vm1089 = vcmp.eq.s32.totalorder %v591, %v1065
    %vm1090 = vcmp.eq.s32.totalorder %v591, %v1066
    %vm1091 = vcmp.eq.s32.totalorder %v591, %v1067
    %vm1092 = vcmp.eq.s32.totalorder %v591, %v1068
    %vm1093 = vcmp.eq.s32.totalorder %v591, %v1069
    %vm1094 = vcmp.eq.s32.totalorder %v591, %v1070
    %vm1095 = vcmp.eq.s32.totalorder %v592, %v1065
    %vm1096 = vcmp.eq.s32.totalorder %v592, %v1066
    %vm1097 = vcmp.eq.s32.totalorder %v592, %v1067
    %vm1098 = vcmp.eq.s32.totalorder %v592, %v1068
    %vm1099 = vcmp.eq.s32.totalorder %v592, %v1069
    %vm1100 = vcmp.eq.s32.totalorder %v592, %v1070
    %vm1101 = vcmp.eq.s32.totalorder %v593, %v1065
    %vm1102 = vcmp.eq.s32.totalorder %v593, %v1066
    %vm1103 = vcmp.eq.s32.totalorder %v593, %v1067
    %vm1104 = vcmp.eq.s32.totalorder %v593, %v1068
    %vm1105 = vcmp.eq.s32.totalorder %v593, %v1069
    %vm1106 = vcmp.eq.s32.totalorder %v593, %v1070
    %vm1107 = vcmp.eq.s32.totalorder %v594, %v1065
    %vm1108 = vcmp.eq.s32.totalorder %v594, %v1066
    %vm1109 = vcmp.eq.s32.totalorder %v594, %v1067
    %vm1110 = vcmp.eq.s32.totalorder %v594, %v1068
    %vm1111 = vcmp.eq.s32.totalorder %v594, %v1069
    %vm1112 = vcmp.eq.s32.totalorder %v594, %v1070
    %vm1113 = vcmp.eq.s32.totalorder %v595, %v1065
    %vm1114 = vcmp.eq.s32.totalorder %v595, %v1066
    %vm1115 = vcmp.eq.s32.totalorder %v595, %v1067
    %vm1116 = vcmp.eq.s32.totalorder %v595, %v1068
    %vm1117 = vcmp.eq.s32.totalorder %v595, %v1069
    %vm1118 = vcmp.eq.s32.totalorder %v595, %v1070
    %vm1119 = vcmp.eq.s32.totalorder %v596, %v1065
    %vm1120 = vcmp.eq.s32.totalorder %v596, %v1066
    %vm1121 = vcmp.eq.s32.totalorder %v596, %v1067
    %vm1122 = vcmp.eq.s32.totalorder %v596, %v1068
    %vm1123 = vcmp.eq.s32.totalorder %v596, %v1069
    %vm1124 = vcmp.eq.s32.totalorder %v596, %v1070
    %vm1125 = vcmp.eq.s32.totalorder %v597, %v1065
    %vm1126 = vcmp.eq.s32.totalorder %v597, %v1066
    %vm1127 = vcmp.eq.s32.totalorder %v597, %v1067
    %vm1128 = vcmp.eq.s32.totalorder %v597, %v1068
    %vm1129 = vcmp.eq.s32.totalorder %v597, %v1069
    %vm1130 = vcmp.eq.s32.totalorder %v597, %v1070
    %vm1131 = vcmp.eq.s32.totalorder %v598, %v1065
    %vm1132 = vcmp.eq.s32.totalorder %v598, %v1066
    %vm1133 = vcmp.eq.s32.totalorder %v598, %v1067
    %vm1134 = vcmp.eq.s32.totalorder %v598, %v1068
    %vm1135 = vcmp.eq.s32.totalorder %v598, %v1069
    %vm1136 = vcmp.eq.s32.totalorder %v598, %v1070
    %vm1137 = vcmp.eq.s32.totalorder %v599, %v1065
    %vm1138 = vcmp.eq.s32.totalorder %v599, %v1066
    %vm1139 = vcmp.eq.s32.totalorder %v599, %v1067
    %vm1140 = vcmp.eq.s32.totalorder %v599, %v1068
    %vm1141 = vcmp.eq.s32.totalorder %v599, %v1069
    %vm1142 = vcmp.eq.s32.totalorder %v599, %v1070
    %vm1143 = vcmp.eq.s32.totalorder %v600, %v1065
    %vm1144 = vcmp.eq.s32.totalorder %v600, %v1066
    %vm1145 = vcmp.eq.s32.totalorder %v600, %v1067
    %vm1146 = vcmp.eq.s32.totalorder %v600, %v1068
    %vm1147 = vcmp.eq.s32.totalorder %v600, %v1069
    %vm1148 = vcmp.eq.s32.totalorder %v600, %v1070
    %vm1149 = vcmp.eq.s32.totalorder %v601, %v1065
    %vm1150 = vcmp.eq.s32.totalorder %v601, %v1066
    %vm1151 = vcmp.eq.s32.totalorder %v601, %v1067
    %vm1152 = vcmp.eq.s32.totalorder %v601, %v1068
    %vm1153 = vcmp.eq.s32.totalorder %v601, %v1069
    %vm1154 = vcmp.eq.s32.totalorder %v601, %v1070
    %vm1155 = vcmp.eq.s32.totalorder %v602, %v1065
    %vm1156 = vcmp.eq.s32.totalorder %v602, %v1066
    %vm1157 = vcmp.eq.s32.totalorder %v602, %v1067
    %vm1158 = vcmp.eq.s32.totalorder %v602, %v1068
    %vm1159 = vcmp.eq.s32.totalorder %v602, %v1069
    %vm1160 = vcmp.eq.s32.totalorder %v602, %v1070
    %vm1161 = vcmp.eq.s32.totalorder %v603, %v1065
    %vm1162 = vcmp.eq.s32.totalorder %v603, %v1066
    %vm1163 = vcmp.eq.s32.totalorder %v603, %v1067
    %vm1164 = vcmp.eq.s32.totalorder %v603, %v1068
    %vm1165 = vcmp.eq.s32.totalorder %v603, %v1069
    %vm1166 = vcmp.eq.s32.totalorder %v603, %v1070
    %v1167 = vsel %vm1071, 1, 0
    %v1168 = vsel %vm1072, 1, 0
    %v1169 = vsel %vm1073, 1, 0
    %v1170 = vsel %vm1074, 1, 0
    %v1171 = vsel %vm1075, 1, 0
    %v1172 = vsel %vm1076, 1, 0
    %v1173 = vsel %vm1077, 1, 0
    %v1174 = vsel %vm1078, 1, 0
    %v1175 = vsel %vm1079, 1, 0
    %v1176 = vsel %vm1080, 1, 0
    %v1177 = vsel %vm1081, 1, 0
    %v1178 = vsel %vm1082, 1, 0
    %v1179 = vsel %vm1083, 1, 0
    %v1180 = vsel %vm1084, 1, 0
    %v1181 = vsel %vm1085, 1, 0
    %v1182 = vsel %vm1086, 1, 0
    %v1183 = vsel %vm1087, 1, 0
    %v1184 = vsel %vm1088, 1, 0
    %v1185 = vsel %vm1089, 1, 0
    %v1186 = vsel %vm1090, 1, 0
    %v1187 = vsel %vm1091, 1, 0
    %v1188 = vsel %vm1092, 1, 0
    %v1189 = vsel %vm1093, 1, 0
    %v1190 = vsel %vm1094, 1, 0
    %v1191 = vsel %vm1095, 1, 0
    %v1192 = vsel %vm1096, 1, 0
    %v1193 = vsel %vm1097, 1, 0
    %v1194 = vsel %vm1098, 1, 0
    %v1195 = vsel %vm1099, 1, 0
    %v1196 = vsel %vm1100, 1, 0
    %v1197 = vsel %vm1101, 1, 0
    %v1198 = vsel %vm1102, 1, 0
    %v1199 = vsel %vm1103, 1, 0
    %v1200 = vsel %vm1104, 1, 0
    %v1201 = vsel %vm1105, 1, 0
    %v1202 = vsel %vm1106, 1, 0
    %v1203 = vsel %vm1107, 1, 0
    %v1204 = vsel %vm1108, 1, 0
    %v1205 = vsel %vm1109, 1, 0
    %v1206 = vsel %vm1110, 1, 0
    %v1207 = vsel %vm1111, 1, 0
    %v1208 = vsel %vm1112, 1, 0
    %v1209 = vsel %vm1113, 1, 0
    %v1210 = vsel %vm1114, 1, 0
    %v1211 = vsel %vm1115, 1, 0
    %v1212 = vsel %vm1116, 1, 0
    %v1213 = vsel %vm1117, 1, 0
    %v1214 = vsel %vm1118, 1, 0
    %v1215 = vsel %vm1119, 1, 0
    %v1216 = vsel %vm1120, 1, 0
    %v1217 = vsel %vm1121, 1, 0
    %v1218 = vsel %vm1122, 1, 0
    %v1219 = vsel %vm1123, 1, 0
    %v1220 = vsel %vm1124, 1, 0
    %v1221 = vsel %vm1125, 1, 0
    %v1222 = vsel %vm1126, 1, 0
    %v1223 = vsel %vm1127, 1, 0
    %v1224 = vsel %vm1128, 1, 0
    %v1225 = vsel %vm1129, 1, 0
    %v1226 = vsel %vm1130, 1, 0
    %v1227 = vsel %vm1131, 1, 0
    %v1228 = vsel %vm1132, 1, 0
    %v1229 = vsel %vm1133, 1, 0
    %v1230 = vsel %vm1134, 1, 0
    %v1231 = vsel %vm1135, 1, 0
    %v1232 = vsel %vm1136, 1, 0
    %v1233 = vsel %vm1137, 1, 0
    %v1234 = vsel %vm1138, 1, 0
    %v1235 = vsel %vm1139, 1, 0
    %v1236 = vsel %vm1140, 1, 0
    %v1237 = vsel %vm1141, 1, 0
    %v1238 = vsel %vm1142, 1, 0
    %v1239 = vsel %vm1143, 1, 0
    %v1240 = vsel %vm1144, 1, 0
    %v1241 = vsel %vm1145, 1, 0
    %v1242 = vsel %vm1146, 1, 0
    %v1243 = vsel %vm1147, 1, 0
    %v1244 = vsel %vm1148, 1, 0
    %v1245 = vsel %vm1149, 1, 0
    %v1246 = vsel %vm1150, 1, 0
    %v1247 = vsel %vm1151, 1, 0
    %v1248 = vsel %vm1152, 1, 0
    %v1249 = vsel %vm1153, 1, 0
    %v1250 = vsel %vm1154, 1, 0
    %v1251 = vsel %vm1155, 1, 0
    %v1252 = vsel %vm1156, 1, 0
    %v1253 = vsel %vm1157, 1, 0
    %v1254 = vsel %vm1158, 1, 0
    %v1255 = vsel %vm1159, 1, 0
    %v1256 = vsel %vm1160, 1, 0
    %v1257 = vsel %vm1161, 1, 0
    %v1258 = vsel %vm1162, 1, 0
    %v1259 = vsel %vm1163, 1, 0
    %v1260 = vsel %vm1164, 1, 0
    %v1261 = vsel %vm1165, 1, 0
    %v1262 = vsel %vm1166, 1, 0
    %v1263 = vcvt.s32.f32 %v1167
    %v1264 = vcvt.s32.f32 %v1168
    %v1265 = vcvt.s32.f32 %v1169
    %v1266 = vcvt.s32.f32 %v1170
    %v1267 = vcvt.s32.f32 %v1171
    %v1268 = vcvt.s32.f32 %v1172
    %v1269 = vcvt.s32.f32 %v1173
    %v1270 = vcvt.s32.f32 %v1174
    %v1271 = vcvt.s32.f32 %v1175
    %v1272 = vcvt.s32.f32 %v1176
    %v1273 = vcvt.s32.f32 %v1177
    %v1274 = vcvt.s32.f32 %v1178
    %v1275 = vcvt.s32.f32 %v1179
    %v1276 = vcvt.s32.f32 %v1180
    %v1277 = vcvt.s32.f32 %v1181
    %v1278 = vcvt.s32.f32 %v1182
    %v1279 = vcvt.s32.f32 %v1183
    %v1280 = vcvt.s32.f32 %v1184
    %v1281 = vcvt.s32.f32 %v1185
    %v1282 = vcvt.s32.f32 %v1186
    %v1283 = vcvt.s32.f32 %v1187
    %v1284 = vcvt.s32.f32 %v1188
    %v1285 = vcvt.s32.f32 %v1189
    %v1286 = vcvt.s32.f32 %v1190
    %v1287 = vcvt.s32.f32 %v1191
    %v1288 = vcvt.s32.f32 %v1192
    %v1289 = vcvt.s32.f32 %v1193
    %v1290 = vcvt.s32.f32 %v1194
    %v1291 = vcvt.s32.f32 %v1195
    %v1292 = vcvt.s32.f32 %v1196
    %v1293 = vcvt.s32.f32 %v1197
    %v1294 = vcvt.s32.f32 %v1198
    %v1295 = vcvt.s32.f32 %v1199
    %v1296 = vcvt.s32.f32 %v1200
    %v1297 = vcvt.s32.f32 %v1201
    %v1298 = vcvt.s32.f32 %v1202
    %v1299 = vcvt.s32.f32 %v1203
    %v1300 = vcvt.s32.f32 %v1204
    %v1301 = vcvt.s32.f32 %v1205
    %v1302 = vcvt.s32.f32 %v1206
    %v1303 = vcvt.s32.f32 %v1207
    %v1304 = vcvt.s32.f32 %v1208
    %v1305 = vcvt.s32.f32 %v1209
    %v1306 = vcvt.s32.f32 %v1210
    %v1307 = vcvt.s32.f32 %v1211
    %v1308 = vcvt.s32.f32 %v1212
    %v1309 = vcvt.s32.f32 %v1213
    %v1310 = vcvt.s32.f32 %v1214
    %v1311 = vcvt.s32.f32 %v1215
    %v1312 = vcvt.s32.f32 %v1216
    %v1313 = vcvt.s32.f32 %v1217
    %v1314 = vcvt.s32.f32 %v1218
    %v1315 = vcvt.s32.f32 %v1219
    %v1316 = vcvt.s32.f32 %v1220
    %v1317 = vcvt.s32.f32 %v1221
    %v1318 = vcvt.s32.f32 %v1222
    %v1319 = vcvt.s32.f32 %v1223
    %v1320 = vcvt.s32.f32 %v1224
    %v1321 = vcvt.s32.f32 %v1225
    %v1322 = vcvt.s32.f32 %v1226
    %v1323 = vcvt.s32.f32 %v1227
    %v1324 = vcvt.s32.f32 %v1228
    %v1325 = vcvt.s32.f32 %v1229
    %v1326 = vcvt.s32.f32 %v1230
    %v1327 = vcvt.s32.f32 %v1231
    %v1328 = vcvt.s32.f32 %v1232
    %v1329 = vcvt.s32.f32 %v1233
    %v1330 = vcvt.s32.f32 %v1234
    %v1331 = vcvt.s32.f32 %v1235
    %v1332 = vcvt.s32.f32 %v1236
    %v1333 = vcvt.s32.f32 %v1237
    %v1334 = vcvt.s32.f32 %v1238
    %v1335 = vcvt.s32.f32 %v1239
    %v1336 = vcvt.s32.f32 %v1240
    %v1337 = vcvt.s32.f32 %v1241
    %v1338 = vcvt.s32.f32 %v1242
    %v1339 = vcvt.s32.f32 %v1243
    %v1340 = vcvt.s32.f32 %v1244
    %v1341 = vcvt.s32.f32 %v1245
    %v1342 = vcvt.s32.f32 %v1246
    %v1343 = vcvt.s32.f32 %v1247
    %v1344 = vcvt.s32.f32 %v1248
    %v1345 = vcvt.s32.f32 %v1249
    %v1346 = vcvt.s32.f32 %v1250
    %v1347 = vcvt.s32.f32 %v1251
    %v1348 = vcvt.s32.f32 %v1252
    %v1349 = vcvt.s32.f32 %v1253
    %v1350 = vcvt.s32.f32 %v1254
    %v1351 = vcvt.s32.f32 %v1255
    %v1352 = vcvt.s32.f32 %v1256
    %v1353 = vcvt.s32.f32 %v1257
    %v1354 = vcvt.s32.f32 %v1258
    %v1355 = vcvt.s32.f32 %v1259
    %v1356 = vcvt.s32.f32 %v1260
    %v1357 = vcvt.s32.f32 %v1261
    %v1358 = vcvt.s32.f32 %v1262
    %v1359 = vpack.c.bf16 %v1269, %v1263
    %v1360 = vpack.c.bf16 %v1270, %v1264
    %v1361 = vpack.c.bf16 %v1271, %v1265
    %v1362 = vpack.c.bf16 %v1272, %v1266
    %v1363 = vpack.c.bf16 %v1273, %v1267
    %v1364 = vpack.c.bf16 %v1274, %v1268
    %v1365 = vpack.c.bf16 %v1281, %v1275
    %v1366 = vpack.c.bf16 %v1282, %v1276
    %v1367 = vpack.c.bf16 %v1283, %v1277
    %v1368 = vpack.c.bf16 %v1284, %v1278
    %v1369 = vpack.c.bf16 %v1285, %v1279
    %v1370 = vpack.c.bf16 %v1286, %v1280
    %v1371 = vpack.c.bf16 %v1293, %v1287
    %v1372 = vpack.c.bf16 %v1294, %v1288
    %v1373 = vpack.c.bf16 %v1295, %v1289
    %v1374 = vpack.c.bf16 %v1296, %v1290
    %v1375 = vpack.c.bf16 %v1297, %v1291
    %v1376 = vpack.c.bf16 %v1298, %v1292
    %v1377 = vpack.c.bf16 %v1305, %v1299
    %v1378 = vpack.c.bf16 %v1306, %v1300
    %v1379 = vpack.c.bf16 %v1307, %v1301
    %v1380 = vpack.c.bf16 %v1308, %v1302
    %v1381 = vpack.c.bf16 %v1309, %v1303
    %v1382 = vpack.c.bf16 %v1310, %v1304
    %v1383 = vpack.c.bf16 %v1317, %v1311
    %v1384 = vpack.c.bf16 %v1318, %v1312
    %v1385 = vpack.c.bf16 %v1319, %v1313
    %v1386 = vpack.c.bf16 %v1320, %v1314
    %v1387 = vpack.c.bf16 %v1321, %v1315
    %v1388 = vpack.c.bf16 %v1322, %v1316
    %v1389 = vpack.c.bf16 %v1329, %v1323
    %v1390 = vpack.c.bf16 %v1330, %v1324
    %v1391 = vpack.c.bf16 %v1331, %v1325
    %v1392 = vpack.c.bf16 %v1332, %v1326
    %v1393 = vpack.c.bf16 %v1333, %v1327
    %v1394 = vpack.c.bf16 %v1334, %v1328
    %v1395 = vpack.c.bf16 %v1341, %v1335
    %v1396 = vpack.c.bf16 %v1342, %v1336
    %v1397 = vpack.c.bf16 %v1343, %v1337
    %v1398 = vpack.c.bf16 %v1344, %v1338
    %v1399 = vpack.c.bf16 %v1345, %v1339
    %v1400 = vpack.c.bf16 %v1346, %v1340
    %v1401 = vpack.c.bf16 %v1353, %v1347
    %v1402 = vpack.c.bf16 %v1354, %v1348
    %v1403 = vpack.c.bf16 %v1355, %v1349
    %v1404 = vpack.c.bf16 %v1356, %v1350
    %v1405 = vpack.c.bf16 %v1357, %v1351
    %v1406 = vpack.c.bf16 %v1358, %v1352
    %v1407 = vpack.c.bf16 %v584, %v583
    %v1408 = vpack.c.bf16 %v586, %v585
    %1409 = vmatpush.bf16.msra.mxu0 %v1401
    %1410 = vmatpush.bf16.msra.mxu0 %v1395
    %1411 = vmatpush.bf16.msra.mxu0 %v1389
    %1412 = vmatpush.bf16.msra.mxu0 %v1383
    %1413 = vmatpush.bf16.msra.mxu0 %v1377
    %1414 = vmatpush.bf16.msra.mxu0 %v1371
    %1415 = vmatpush.bf16.msra.mxu0 %v1365
    %1416 = vmatpush.bf16.msra.mxu0 %v1359
    %1417 = vmatmul.bf16.gmra.mxu0 %v1407
    %v1418 = vpop.f32.mrf.mxu0
    %v1419 = vadd.f32 0.0, %v1418
    %v1420 = vpop.f32.mrf.mxu0
    %v1421 = vadd.f32 0.0, %v1420
    %1422 = vmatmul.bf16.gmra.mxu0 %v1408
    %v1423 = vpop.f32.mrf.mxu0
    %v1424 = vadd.f32 0.0, %v1423
    %v1425 = vpop.f32.mrf.mxu0
    %v1426 = vadd.f32 0.0, %v1425
    %1427 = vdwg.mxu0
    %1428 = vmatpush.bf16.msra.mxu0 %v1402
    %1429 = vmatpush.bf16.msra.mxu0 %v1396
    %1430 = vmatpush.bf16.msra.mxu0 %v1390
    %1431 = vmatpush.bf16.msra.mxu0 %v1384
    %1432 = vmatpush.bf16.msra.mxu0 %v1378
    %1433 = vmatpush.bf16.msra.mxu0 %v1372
    %1434 = vmatpush.bf16.msra.mxu0 %v1366
    %1435 = vmatpush.bf16.msra.mxu0 %v1360
    %1436 = vmatmul.bf16.gmra.mxu0 %v1407
    %v1437 = vpop.f32.mrf.mxu0
    %v1438 = vadd.f32 0.0, %v1437
    %v1439 = vpop.f32.mrf.mxu0
    %v1440 = vadd.f32 0.0, %v1439
    %1441 = vmatmul.bf16.gmra.mxu0 %v1408
    %v1442 = vpop.f32.mrf.mxu0
    %v1443 = vadd.f32 0.0, %v1442
    %v1444 = vpop.f32.mrf.mxu0
    %v1445 = vadd.f32 0.0, %v1444
    %1446 = vdwg.mxu0
    %1447 = vmatpush.bf16.msra.mxu0 %v1403
    %1448 = vmatpush.bf16.msra.mxu0 %v1397
    %1449 = vmatpush.bf16.msra.mxu0 %v1391
    %1450 = vmatpush.bf16.msra.mxu0 %v1385
    %1451 = vmatpush.bf16.msra.mxu0 %v1379
    %1452 = vmatpush.bf16.msra.mxu0 %v1373
    %1453 = vmatpush.bf16.msra.mxu0 %v1367
    %1454 = vmatpush.bf16.msra.mxu0 %v1361
    %1455 = vmatmul.bf16.gmra.mxu0 %v1407
    %v1456 = vpop.f32.mrf.mxu0
    %v1457 = vadd.f32 0.0, %v1456
    %v1458 = vpop.f32.mrf.mxu0
    %v1459 = vadd.f32 0.0, %v1458
    %1460 = vmatmul.bf16.gmra.mxu0 %v1408
    %v1461 = vpop.f32.mrf.mxu0
    %v1462 = vadd.f32 0.0, %v1461
    %v1463 = vpop.f32.mrf.mxu0
    %v1464 = vadd.f32 0.0, %v1463
    %1465 = vdwg.mxu0
    %1466 = vmatpush.bf16.msra.mxu0 %v1404
    %1467 = vmatpush.bf16.msra.mxu0 %v1398
    %1468 = vmatpush.bf16.msra.mxu0 %v1392
    %1469 = vmatpush.bf16.msra.mxu0 %v1386
    %1470 = vmatpush.bf16.msra.mxu0 %v1380
    %1471 = vmatpush.bf16.msra.mxu0 %v1374
    %1472 = vmatpush.bf16.msra.mxu0 %v1368
    %1473 = vmatpush.bf16.msra.mxu0 %v1362
    %1474 = vmatmul.bf16.gmra.mxu0 %v1407
    %v1475 = vpop.f32.mrf.mxu0
    %v1476 = vadd.f32 0.0, %v1475
    %v1477 = vpop.f32.mrf.mxu0
    %v1478 = vadd.f32 0.0, %v1477
    %1479 = vmatmul.bf16.gmra.mxu0 %v1408
    %v1480 = vpop.f32.mrf.mxu0
    %v1481 = vadd.f32 0.0, %v1480
    %v1482 = vpop.f32.mrf.mxu0
    %v1483 = vadd.f32 0.0, %v1482
    %1484 = vdwg.mxu0
    %1485 = vmatpush.bf16.msra.mxu0 %v1405
    %1486 = vmatpush.bf16.msra.mxu0 %v1399
    %1487 = vmatpush.bf16.msra.mxu0 %v1393
    %1488 = vmatpush.bf16.msra.mxu0 %v1387
    %1489 = vmatpush.bf16.msra.mxu0 %v1381
    %1490 = vmatpush.bf16.msra.mxu0 %v1375
    %1491 = vmatpush.bf16.msra.mxu0 %v1369
    %1492 = vmatpush.bf16.msra.mxu0 %v1363
    %1493 = vmatmul.bf16.gmra.mxu0 %v1407
    %v1494 = vpop.f32.mrf.mxu0
    %v1495 = vadd.f32 0.0, %v1494
    %v1496 = vpop.f32.mrf.mxu0
    %v1497 = vadd.f32 0.0, %v1496
    %1498 = vmatmul.bf16.gmra.mxu0 %v1408
    %v1499 = vpop.f32.mrf.mxu0
    %v1500 = vadd.f32 0.0, %v1499
    %v1501 = vpop.f32.mrf.mxu0
    %v1502 = vadd.f32 0.0, %v1501
    %1503 = vdwg.mxu0
    %1504 = vmatpush.bf16.msra.mxu0 %v1406
    %1505 = vmatpush.bf16.msra.mxu0 %v1400
    %1506 = vmatpush.bf16.msra.mxu0 %v1394
    %1507 = vmatpush.bf16.msra.mxu0 %v1388
    %1508 = vmatpush.bf16.msra.mxu0 %v1382
    %1509 = vmatpush.bf16.msra.mxu0 %v1376
    %1510 = vmatpush.bf16.msra.mxu0 %v1370
    %1511 = vmatpush.bf16.msra.mxu0 %v1364
    %1512 = vmatmul.bf16.gmra.mxu0 %v1407
    %v1513 = vpop.f32.mrf.mxu0
    %v1514 = vadd.f32 0.0, %v1513
    %v1515 = vpop.f32.mrf.mxu0
    %v1516 = vadd.f32 0.0, %v1515
    %1517 = vmatmul.bf16.gmra.mxu0 %v1408
    %v1518 = vpop.f32.mrf.mxu0
    %v1519 = vadd.f32 0.0, %v1518
    %v1520 = vpop.f32.mrf.mxu0
    %v1521 = vadd.f32 0.0, %v1520
    %1522 = vdwg.mxu0
    %v1523 = vmul.f32 %v959, %v978
    %v1524 = vmul.f32 %v961, %v980
    %v1525 = vmul.f32 %v964, %v983
    %v1526 = vmul.f32 %v966, %v985
    %v1527 = vadd.f32 %v1523, %v1524
    %v1528 = vadd.f32 %v1527, %v1525
    %v1529 = vadd.f32 %v1528, %v1526
    %v1530 = vrot.slane %v1529, 4
    %v1531 = vadd.f32 %v1529, %v1530
    %v1532 = vrot.slane %v1531, 2
    %v1533 = vadd.f32 %v1531, %v1532
    %v1534 = vrot.slane %v1533, 1
    %v1535 = vadd.f32 %v1533, %v1534
    %v1536 = vmul.f32 %v997, %v1419
    %v1537 = vmul.f32 %v999, %v1421
    %v1538 = vmul.f32 %v1002, %v1424
    %v1539 = vmul.f32 %v1004, %v1426
    %v1540 = vadd.f32 %v1536, %v1537
    %v1541 = vadd.f32 %v1540, %v1538
    %v1542 = vadd.f32 %v1541, %v1539
    %v1543 = vrot.slane %v1542, 4
    %v1544 = vadd.f32 %v1542, %v1543
    %v1545 = vrot.slane %v1544, 2
    %v1546 = vadd.f32 %v1544, %v1545
    %v1547 = vrot.slane %v1546, 1
    %v1548 = vadd.f32 %v1546, %v1547
    %v1549 = vmul.f32 %v1438, %v1457
    %v1550 = vmul.f32 %v1440, %v1459
    %v1551 = vmul.f32 %v1443, %v1462
    %v1552 = vmul.f32 %v1445, %v1464
    %v1553 = vadd.f32 %v1549, %v1550
    %v1554 = vadd.f32 %v1553, %v1551
    %v1555 = vadd.f32 %v1554, %v1552
    %v1556 = vrot.slane %v1555, 4
    %v1557 = vadd.f32 %v1555, %v1556
    %v1558 = vrot.slane %v1557, 2
    %v1559 = vadd.f32 %v1557, %v1558
    %v1560 = vrot.slane %v1559, 1
    %v1561 = vadd.f32 %v1559, %v1560
    %v1562 = vmul.f32 %v1016, %v1035
    %v1563 = vmul.f32 %v1018, %v1037
    %v1564 = vmul.f32 %v1021, %v1040
    %v1565 = vmul.f32 %v1023, %v1042
    %v1566 = vadd.f32 %v1562, %v1563
    %v1567 = vadd.f32 %v1566, %v1564
    %v1568 = vadd.f32 %v1567, %v1565
    %v1569 = vrot.slane %v1568, 4
    %v1570 = vadd.f32 %v1568, %v1569
    %v1571 = vrot.slane %v1570, 2
    %v1572 = vadd.f32 %v1570, %v1571
    %v1573 = vrot.slane %v1572, 1
    %v1574 = vadd.f32 %v1572, %v1573
    %v1575 = vmul.f32 %v1054, %v1476
    %v1576 = vmul.f32 %v1056, %v1478
    %v1577 = vmul.f32 %v1059, %v1481
    %v1578 = vmul.f32 %v1061, %v1483
    %v1579 = vadd.f32 %v1575, %v1576
    %v1580 = vadd.f32 %v1579, %v1577
    %v1581 = vadd.f32 %v1580, %v1578
    %v1582 = vrot.slane %v1581, 4
    %v1583 = vadd.f32 %v1581, %v1582
    %v1584 = vrot.slane %v1583, 2
    %v1585 = vadd.f32 %v1583, %v1584
    %v1586 = vrot.slane %v1585, 1
    %v1587 = vadd.f32 %v1585, %v1586
    %v1588 = vmul.f32 %v1495, %v1514
    %v1589 = vmul.f32 %v1497, %v1516
    %v1590 = vmul.f32 %v1500, %v1519
    %v1591 = vmul.f32 %v1502, %v1521
    %v1592 = vadd.f32 %v1588, %v1589
    %v1593 = vadd.f32 %v1592, %v1590
    %v1594 = vadd.f32 %v1593, %v1591
    %v1595 = vrot.slane %v1594, 4
    %v1596 = vadd.f32 %v1594, %v1595
    %v1597 = vrot.slane %v1596, 2
    %v1598 = vadd.f32 %v1596, %v1597
    %v1599 = vrot.slane %v1598, 1
    %v1600 = vadd.f32 %v1598, %v1599
    %vm1601 = vcmask 1040384
    %v1602 = vsel %vm1601, %v1535, %v1548
    %vm1603 = vcmask 1041408
    %v1604 = vsel %vm1603, %v1602, %v1561
    %vm1605 = vcmask 1042432
    %v1606 = vsel %vm1605, %v1604, %v1574
    %vm1607 = vcmask 1043456
    %v1608 = vsel %vm1607, %v1606, %v1587
    %vm1609 = vcmask 1044480
    %v1610 = vsel %vm1609, %v1608, %v1600
    %vm1611 = vcmask 1045504
    %v1612 = vsel %vm1611, %v1610, 0.0
    %1613 = vst [vmem:[#allocation2] sm:$0xff] %v1612
    // Predicated region
    $region22: #{tpu_custom_call.1} parent=1 // pred_check
      _
    $region23: #{tpu_custom_call.1} parent=1 // pred_check_branch
      %1615 = sbr.rel (0) target = $region25
    $region24: #{tpu_custom_call.1} parent=1 // pred_region
      %1617 = vsyncadd [#allocation3], 0
      %s1619 = sshll.u32 [#allocation2], 4
      %s1620 = int_to_ptr.vmem [resolvable:$true] %s1619
      %s1621 = sshll.u32 %s5, 4
      %s1622 = int_to_ptr.hbm [resolvable:$true] %s1621
      %1624 = dma.vmem_to_hbm [thread:$0]  %s1620, 128, %s1622, [#allocation3]
    $region25: #{tpu_custom_call.1} parent=1 // pred_fallthru
      _
    // Predicated region
    $region26: #{tpu_custom_call.1} parent=1 // pred_check
      _
    $region27: #{tpu_custom_call.1} parent=1 // pred_check_branch
      %1626 = sbr.rel (0) target = $region29
    $region28: #{tpu_custom_call.1} parent=1 // pred_region
      %1628 = dma.done [#allocation3], 128
    $region29: #{tpu_custom_call.1} parent=1 // pred_fallthru
      _
    %1629 = vsyncpa [#allocation3], 1

</llo_original>
